<compile_context>
chip_gen: v5e
topology: v5e:2x2
jax: 0.10.0
libtpu: 0.0.40
codegen_flags: <defaults>
</compile_context>

<pallas_src>
import functools

import jax
import jax.numpy as jnp
from jax.experimental import pallas as pl
from jax.experimental.pallas import tpu as pltpu

EPS = 1e-5                 # nn.BatchNorm2d default eps
_STATS_CORE_SPLIT = 2      # leading "parallel" axis of pass 1 (uses both v7x TensorCores)


def _round_up(x, m):
    return (x + m - 1) // m * m


def _cdiv(a, b):
    return (a + b - 1) // b


def _pick_vmem_limit():
    """Scoped-VMEM request: ~75% of physical VMEM (128 MiB on v5e/v6e -> 96 MiB,
    64 MiB per TC on v7x -> 48 MiB).  Falls back to a safe 48 MiB if the query fails."""
    try:
        cap = int(pltpu.get_tpu_info().vmem_capacity_bytes)
    except Exception:
        cap = 64 * 1024 * 1024
    if cap <= 0:
        cap = 64 * 1024 * 1024
    return int(min(cap * 3 // 4, 96 * 1024 * 1024))


def _auto_tm(M, Cin, Cout, x_bytes, out_bytes, vmem_limit):
    """Largest M-tile that keeps the per-step working set inside the VMEM budget."""
    fixed = (2 * Cin * Cout * 2                       # weight, double-buffered bf16
             + 2 * 2 * Cout * 4                       # scale + shift (double-buffered)
             + 2 * _STATS_CORE_SPLIT * 16 * Cout * 4  # stats accumulator
             + (4 << 20))                             # margin for compiler scratch
    per_row = (2 * Cin * x_bytes                      # x tile, double-buffered
               + 2 * Cin                              # bf16 cast temporary
               + 12 * Cout                            # y (f32) + y*y / scaled temporaries
               + 2 * Cout * out_bytes)                # out tile, double-buffered (pass 2)
    # NOTE: for very large channel counts (weight alone > budget) a Cout grid axis that
    # tiles the weight would be needed; not implemented (tm just bottoms out at 16).
    tm = max((vmem_limit - fixed) // per_row, 16)
    tm = min(tm, 2048, _round_up(M, 16))
    return max(16, int(tm // 16) * 16)


# --------------------------- Pass 1: column stats ----------------------------
def _stats_kernel(x_ref, w_ref, stats_ref, *, tm, m_total, tiles_per_split, need_mask):
    # x_ref: (tm, Cin) input dtype; w_ref: (Cin, Cout) bf16; stats_ref: (16, Cout) f32
    # stats rows 0:8  = per-sublane partial sums of y
    # stats rows 8:16 = per-sublane partial sums of y*y
    j = pl.program_id(1)

    @pl.when(j == 0)
    def _():
        stats_ref[...] = jnp.zeros_like(stats_ref)

    x = x_ref[...]
    if need_mask:
        # Zero rows past the true M (boundary tile) and rows of clamped duplicate tiles.
        t = pl.program_id(0) * tiles_per_split + j
        row = t * tm + jax.lax.broadcasted_iota(jnp.int32, x.shape, 0)
        x = jnp.where(row < m_total, x, 0)

    y = jnp.dot(x.astype(w_ref.dtype), w_ref[...],
                preferred_element_type=jnp.float32)            # (tm, Cout) f32
    # Per-sublane partial sums: leading-axis reduce stays on the VALUs (no XLU, no concat).
    y3 = y.reshape(tm // 8, 8, y.shape[-1])
    stats_ref[0:8, :] += jnp.sum(y3, axis=0)
    stats_ref[8:16, :] += jnp.sum(y3 * y3, axis=0)


# ----------------- Pass 2: matmul + fused BN affine + ReLU -------------------
def _apply_kernel(x_ref, w_ref, scale_ref, shift_ref, o_ref):
    y = jnp.dot(x_ref[...].astype(w_ref.dtype), w_ref[...],
                preferred_element_type=jnp.float32)
    out = y * scale_ref[...] + shift_ref[...]
    o_ref[...] = jnp.maximum(out, 0.0).astype(o_ref.dtype)


# ------------------------------- Wrappers -------------------------------------
def conv2d_block_nhwc(x_nhwc, conv_w, bn_gamma, bn_beta, *, tm=None,
                      matmul_dtype=jnp.bfloat16, out_dtype=None, eps=EPS):
    """Core (transpose-free) path. x_nhwc: (N, H, W, Cin), conv_w: (Cout, Cin, 1, 1)."""
    assert conv_w.shape[2:] == (1, 1), "only the 1x1 / stride 1 / groups 1 config is implemented"
    # TODO(synk): general kernel sizes / strides / padding / groups are not implemented
    #             (the module's default configuration is 1x1 / stride 1 / groups 1).
    N, H, W, Cin = x_nhwc.shape
    Cout = conv_w.shape[0]
    M = N * H * W
    out_dtype = x_nhwc.dtype if out_dtype is None else out_dtype

    # Free, view-like reshapes only -- no HBM padding of x, no post-kernel slices.
    x2d = x_nhwc.reshape(M, Cin)
    w2d = conv_w.reshape(Cout, Cin).T.astype(matmul_dtype)     # (Cin, Cout), tiny

    vmem_limit = _pick_vmem_limit()
    if tm is None:
        tm = _auto_tm(M, Cin, Cout, x2d.dtype.itemsize,
                      jnp.dtype(out_dtype).itemsize, vmem_limit)
    else:
        tm = max(16, min((int(tm) // 16) * 16, _round_up(M, 16)))

    n_tiles = _cdiv(M, tm)
    n_split = _STATS_CORE_SPLIT
    tiles_per_split = _cdiv(n_tiles, n_split)
    # Mask needed if the (split x tiles x tm) cover exceeds M (tail rows / duplicate tiles).
    need_mask = (n_split * tiles_per_split * tm) != M

    cp_stats = pltpu.CompilerParams(dimension_semantics=("parallel", "arbitrary"),
                                    vmem_limit_bytes=vmem_limit)
    cp_apply = pltpu.CompilerParams(dimension_semantics=("parallel",),
                                    vmem_limit_bytes=vmem_limit)

    # ---- Pass 1: per-column sum / sum-of-squares of y over all real rows. ----
    stats = pl.pallas_call(
        functools.partial(_stats_kernel, tm=tm, m_total=M,
                          tiles_per_split=tiles_per_split, need_mask=need_mask),
        out_shape=jax.ShapeDtypeStruct((n_split, 16, Cout), jnp.float32),
        grid=(n_split, tiles_per_split),
        in_specs=[
            pl.BlockSpec((tm, Cin),
                         lambda c, j: (jnp.minimum(c * tiles_per_split + j, n_tiles - 1), 0)),
            pl.BlockSpec((Cin, Cout), lambda c, j: (0, 0)),
        ],
        out_specs=pl.BlockSpec((None, 16, Cout), lambda c, j: (c, 0, 0)),
        compiler_params=cp_stats,
    )(x2d, w2d)

    # ---- Tiny (Cout,)-sized glue: batch stats -> single fused affine. ----
    sum_y = jnp.sum(stats[:, 0:8, :], axis=(0, 1))
    sum_y2 = jnp.sum(stats[:, 8:16, :], axis=(0, 1))
    mean = sum_y / M
    var = jnp.maximum(sum_y2 / M - mean * mean, 0.0)
    inv_std = jax.lax.rsqrt(var + eps)
    g = bn_gamma.astype(jnp.float32)
    b = bn_beta.astype(jnp.float32)
    scale = (g * inv_std).reshape(1, Cout)
    shift = (b - mean * g * inv_std).reshape(1, Cout)
    # TODO(synk): BatchNorm running_mean / running_var buffer updates (training-mode side
    #             effect of the PyTorch module) are not reproduced; only the forward output.

    # ---- Pass 2: recompute y per tile, apply scale/shift + ReLU (parallel over M). ----
    out2d = pl.pallas_call(
        _apply_kernel,
        out_shape=jax.ShapeDtypeStruct((M, Cout), out_dtype),
        grid=(n_tiles,),
        in_specs=[
            pl.BlockSpec((tm, Cin), lambda i: (i, 0)),
            pl.BlockSpec((Cin, Cout), lambda i: (0, 0)),
            pl.BlockSpec((1, Cout), lambda i: (0, 0)),
            pl.BlockSpec((1, Cout), lambda i: (0, 0)),
        ],
        out_specs=pl.BlockSpec((tm, Cout), lambda i: (i, 0)),
        compiler_params=cp_apply,
    )(x2d, w2d, scale, shift)

    return out2d.reshape(N, H, W, Cout)


def conv2d_block(x_nchw, conv_w, bn_gamma, bn_beta, *, tm=None,
                 matmul_dtype=jnp.bfloat16, out_dtype=None):
    """PyTorch-interface wrapper (NCHW in / NCHW out).  The transposes are layout plumbing
    only; keep the surrounding model NHWC and call conv2d_block_nhwc to avoid them."""
    out_nhwc = conv2d_block_nhwc(jnp.transpose(x_nchw, (0, 2, 3, 1)),
                                 conv_w, bn_gamma, bn_beta,
                                 tm=tm, matmul_dtype=matmul_dtype, out_dtype=out_dtype)
    return jnp.transpose(out_nhwc, (0, 3, 1, 2))


# ------------------------------- Reference ------------------------------------
def _reference(x_nchw, conv_w, bn_gamma, bn_beta, matmul_dtype=jnp.bfloat16):
    """Pure-JAX reference matching Conv2DBlock.forward (train-mode BN), using the same
    bf16 matmul inputs / f32 accumulation as the kernel."""
    N, Cin, H, W = x_nchw.shape
    Cout = conv_w.shape[0]
    x2d = jnp.transpose(x_nchw, (0, 2, 3, 1)).reshape(-1, Cin).astype(matmul_dtype)
    w2d = conv_w.reshape(Cout, Cin).T.astype(matmul_dtype)
    y = jnp.dot(x2d, w2d, preferred_element_type=jnp.float32)
    mean = y.mean(axis=0)
    var = jnp.maximum((y * y).mean(axis=0) - mean * mean, 0.0)
    inv_std = jax.lax.rsqrt(var + EPS)
    out = jnp.maximum((y - mean) * inv_std * bn_gamma.astype(jnp.float32)
                      + bn_beta.astype(jnp.float32), 0.0)
    return jnp.transpose(out.reshape(N, H, W, Cout), (0, 3, 1, 2)).astype(x_nchw.dtype)


if __name__ == "__main__":
    key = jax.random.PRNGKey(0)
    kx, kw, kg, kb = jax.random.split(key, 4)

    N, Cin, H, W = 2, 4, 16, 16
    Cout = 8

    x = jax.random.normal(kx, (N, Cin, H, W), dtype=jnp.float32)
    conv_w = jax.random.normal(kw, (Cout, Cin, 1, 1), dtype=jnp.float32) * 0.1
    bn_gamma = 1.0 + 0.1 * jax.random.normal(kg, (Cout,), dtype=jnp.float32)
    bn_beta = 0.1 * jax.random.normal(kb, (Cout,), dtype=jnp.float32)

    # tm=192 so the toy shape (M = 512) exercises multi-step accumulation, the two-way
    # stats split, the masked tail / clamped duplicate tile, and a partial output tile.
    fn = jax.jit(functools.partial(conv2d_block, tm=192))
    out = jax.block_until_ready(fn(x, conv_w, bn_gamma, bn_beta))

    ref = _reference(x, conv_w, bn_gamma, bn_beta)
    assert out.shape == (N, Cout, H, W)
    assert jnp.allclose(out, ref, atol=2e-3, rtol=2e-3), "mismatch vs reference"

    print("KERNEL_OK")
</pallas_src>

<mosaic_0001>
module attributes {stable_mosaic.version = 11 : i64} {
  func.func @_stats_kernel(%arg0: i32, %arg1: i32, %arg2: memref<192x4xf32, #tpu.memory_space<vmem>>, %arg3: memref<4x8xbf16, #tpu.memory_space<vmem>>, %arg4: memref<1x16x8xf32, #tpu.memory_space<vmem>>) attributes {dimension_semantics = [#tpu.dimension_semantics<parallel>, #tpu.dimension_semantics<arbitrary>], iteration_bounds = array<i64: 2, 2>, scalar_prefetch = 0 : i64, scratch_operands = 0 : i64, tpu.core_type = #tpu.core_type<tc>, window_params = [{transform_indices = @transform_0, window_bounds = array<i64: 192, 4>}, {pipeline_mode = #tpu.pipeline_mode<synchronous>, transform_indices = @transform_1, window_bounds = array<i64: 4, 8>}, {transform_indices = @transform_2, window_bounds = array<i64: 1, 16, 8>}]} {
    %c0_i32 = arith.constant 0 : i32
    %0 = arith.cmpi eq, %arg1, %c0_i32 : i32
    %1 = arith.extui %0 : i1 to i32
    %c0_i32_0 = arith.constant 0 : i32
    %2 = arith.cmpi ne, %1, %c0_i32_0 : i32
    scf.if %2 {
      %cst_18 = arith.constant 0.000000e+00 : f32
      %34 = vector.broadcast %cst_18 : f32 to vector<16x8xf32>
      %c0_19 = arith.constant 0 : index
      %c0_20 = arith.constant 0 : index
      %c0_21 = arith.constant 0 : index
      %35 = vector.load %arg4[%c0_19, %c0_20, %c0_21] : memref<1x16x8xf32, #tpu.memory_space<vmem>>, vector<1x16x8xf32>
      %36 = vector.shape_cast %35 : vector<1x16x8xf32> to vector<16x8xf32>
      %37 = vector.shape_cast %34 : vector<16x8xf32> to vector<1x16x8xf32>
      tpu.vector_store %arg4[%c0_19, %c0_20, %c0_21], %37 {strides = array<i32>} : memref<1x16x8xf32, #tpu.memory_space<vmem>>, vector<1x16x8xf32>,
    } else {
    }
    %c0 = arith.constant 0 : index
    %c0_1 = arith.constant 0 : index
    %3 = vector.load %arg2[%c0, %c0_1] : memref<192x4xf32, #tpu.memory_space<vmem>>, vector<192x4xf32>
    %c2_i32 = arith.constant 2 : i32
    %4 = arith.muli %arg0, %c2_i32 : i32
    %5 = arith.addi %4, %arg1 : i32
    %c192_i32 = arith.constant 192 : i32
    %6 = arith.muli %5, %c192_i32 : i32
    %7 = tpu.iota {dimensions = array<i32: 0>} : vector<192x4xi32>
    %8 = vector.broadcast %6 : i32 to vector<192x4xi32>
    %9 = arith.addi %8, %7 : vector<192x4xi32>
    %c512_i32 = arith.constant 512 : i32
    %10 = vector.broadcast %c512_i32 : i32 to vector<192x4xi32>
    %11 = arith.cmpi slt, %9, %10 : vector<192x4xi32>
    %c0_i32_2 = arith.constant 0 : i32
    %12 = arith.sitofp %c0_i32_2 : i32 to f32
    %13 = vector.broadcast %12 : f32 to vector<192x4xf32>
    %14 = arith.select %11, %3, %13 : vector<192x4xi1>, vector<192x4xf32>
    %15 = arith.truncf %14 : vector<192x4xf32> to vector<192x4xbf16>
    %c0_3 = arith.constant 0 : index
    %c0_4 = arith.constant 0 : index
    %16 = vector.load %arg3[%c0_3, %c0_4] : memref<4x8xbf16, #tpu.memory_space<vmem>>, vector<4x8xbf16>
    %cst = arith.constant dense<0.000000e+00> : vector<192x8xf32>
    %17 = tpu.matmul %15, %16, %cst {dimension_numbers = #tpu.dot_dimension_numbers<[1], [0], [0], [1], [0, 0, 1, 1], [], []>} : vector<192x4xbf16>, vector<4x8xbf16>, vector<192x8xf32> -> vector<192x8xf32>
    %18 = vector.shape_cast %17 : vector<192x8xf32> to vector<24x8x8xf32>
    %c0_5 = arith.constant 0 : index
    %c0_6 = arith.constant 0 : index
    %c0_7 = arith.constant 0 : index
    %19 = vector.load %arg4[%c0_5, %c0_6, %c0_7] : memref<1x16x8xf32, #tpu.memory_space<vmem>>, vector<1x8x8xf32>
    %20 = vector.shape_cast %19 : vector<1x8x8xf32> to vector<8x8xf32>
    %cst_8 = arith.constant dense<0.000000e+00> : vector<8x8xf32>
    %21 = vector.multi_reduction <add>, %18, %cst_8 [0] : vector<24x8x8xf32> to vector<8x8xf32>
    %22 = arith.addf %20, %21 : vector<8x8xf32>
    %c0_9 = arith.constant 0 : index
    %c0_10 = arith.constant 0 : index
    %c0_11 = arith.constant 0 : index
    %23 = vector.load %arg4[%c0_9, %c0_10, %c0_11] : memref<1x16x8xf32, #tpu.memory_space<vmem>>, vector<1x8x8xf32>
    %24 = vector.shape_cast %23 : vector<1x8x8xf32> to vector<8x8xf32>
    %25 = vector.shape_cast %22 : vector<8x8xf32> to vector<1x8x8xf32>
    tpu.vector_store %arg4[%c0_9, %c0_10, %c0_11], %25 {strides = array<i32>} : memref<1x16x8xf32, #tpu.memory_space<vmem>>, vector<1x8x8xf32>,
    %c0_12 = arith.constant 0 : index
    %c8 = arith.constant 8 : index
    %c0_13 = arith.constant 0 : index
    %26 = vector.load %arg4[%c0_12, %c8, %c0_13] : memref<1x16x8xf32, #tpu.memory_space<vmem>>, vector<1x8x8xf32>
    %27 = vector.shape_cast %26 : vector<1x8x8xf32> to vector<8x8xf32>
    %28 = arith.mulf %18, %18 : vector<24x8x8xf32>
    %cst_14 = arith.constant dense<0.000000e+00> : vector<8x8xf32>
    %29 = vector.multi_reduction <add>, %28, %cst_14 [0] : vector<24x8x8xf32> to vector<8x8xf32>
    %30 = arith.addf %27, %29 : vector<8x8xf32>
    %c0_15 = arith.constant 0 : index
    %c8_16 = arith.constant 8 : index
    %c0_17 = arith.constant 0 : index
    %31 = vector.load %arg4[%c0_15, %c8_16, %c0_17] : memref<1x16x8xf32, #tpu.memory_space<vmem>>, vector<1x8x8xf32>
    %32 = vector.shape_cast %31 : vector<1x8x8xf32> to vector<8x8xf32>
    %33 = vector.shape_cast %30 : vector<8x8xf32> to vector<1x8x8xf32>
    tpu.vector_store %arg4[%c0_15, %c8_16, %c0_17], %33 {strides = array<i32>} : memref<1x16x8xf32, #tpu.memory_space<vmem>>, vector<1x8x8xf32>,
    return
  }
  func.func @transform_0(%arg0: i32, %arg1: i32) -> (i32, i32) {
    %c2_i32 = arith.constant 2 : i32
    %0 = arith.muli %arg0, %c2_i32 : i32
    %1 = arith.addi %0, %arg1 : i32
    %c2_i32_0 = arith.constant 2 : i32
    %2 = arith.minsi %1, %c2_i32_0 : i32
    %c0_i32 = arith.constant 0 : i32
    %c0_i32_1 = arith.constant 0 : i32
    return %2, %c0_i32 : i32, i32
  }
  func.func @transform_1(%arg0: i32, %arg1: i32) -> (i32, i32) {
    %c0_i32 = arith.constant 0 : i32
    %c0_i32_0 = arith.constant 0 : i32
    %c0_i32_1 = arith.constant 0 : i32
    return %c0_i32, %c0_i32_0 : i32, i32
  }
  func.func @transform_2(%arg0: i32, %arg1: i32) -> (i32, i32, i32) {
    %c0_i32 = arith.constant 0 : i32
    %c0_i32_0 = arith.constant 0 : i32
    %c0_i32_1 = arith.constant 0 : i32
    return %arg0, %c0_i32, %c0_i32_0 : i32, i32, i32
  }
}

module attributes {stable_mosaic.version = 11 : i64} {
  func.func @_apply_kernel(%arg0: i32, %arg1: memref<192x4xf32, #tpu.memory_space<vmem>>, %arg2: memref<4x8xbf16, #tpu.memory_space<vmem>>, %arg3: memref<1x8xf32, #tpu.memory_space<vmem>>, %arg4: memref<1x8xf32, #tpu.memory_space<vmem>>, %arg5: memref<192x8xf32, #tpu.memory_space<vmem>>) attributes {dimension_semantics = [#tpu.dimension_semantics<parallel>], iteration_bounds = array<i64: 3>, scalar_prefetch = 0 : i64, scratch_operands = 0 : i64, tpu.core_type = #tpu.core_type<tc>, window_params = [{transform_indices = @transform_0, window_bounds = array<i64: 192, 4>}, {pipeline_mode = #tpu.pipeline_mode<synchronous>, transform_indices = @transform_1, window_bounds = array<i64: 4, 8>}, {pipeline_mode = #tpu.pipeline_mode<synchronous>, transform_indices = @transform_2, window_bounds = array<i64: 1, 8>}, {pipeline_mode = #tpu.pipeline_mode<synchronous>, transform_indices = @transform_3, window_bounds = array<i64: 1, 8>}, {transform_indices = @transform_4, window_bounds = array<i64: 192, 8>}]} {
    %c0 = arith.constant 0 : index
    %c0_0 = arith.constant 0 : index
    %0 = vector.load %arg1[%c0, %c0_0] : memref<192x4xf32, #tpu.memory_space<vmem>>, vector<192x4xf32>
    %1 = arith.truncf %0 : vector<192x4xf32> to vector<192x4xbf16>
    %c0_1 = arith.constant 0 : index
    %c0_2 = arith.constant 0 : index
    %2 = vector.load %arg2[%c0_1, %c0_2] : memref<4x8xbf16, #tpu.memory_space<vmem>>, vector<4x8xbf16>
    %cst = arith.constant dense<0.000000e+00> : vector<192x8xf32>
    %3 = tpu.matmul %1, %2, %cst {dimension_numbers = #tpu.dot_dimension_numbers<[1], [0], [0], [1], [0, 0, 1, 1], [], []>} : vector<192x4xbf16>, vector<4x8xbf16>, vector<192x8xf32> -> vector<192x8xf32>
    %c0_3 = arith.constant 0 : index
    %c0_4 = arith.constant 0 : index
    %4 = vector.load %arg3[%c0_3, %c0_4] : memref<1x8xf32, #tpu.memory_space<vmem>>, vector<1x8xf32>
    %5 = vector.broadcast %4 : vector<1x8xf32> to vector<192x8xf32>
    %6 = arith.mulf %3, %5 : vector<192x8xf32>
    %c0_5 = arith.constant 0 : index
    %c0_6 = arith.constant 0 : index
    %7 = vector.load %arg4[%c0_5, %c0_6] : memref<1x8xf32, #tpu.memory_space<vmem>>, vector<1x8xf32>
    %8 = vector.broadcast %7 : vector<1x8xf32> to vector<192x8xf32>
    %9 = arith.addf %6, %8 : vector<192x8xf32>
    %cst_7 = arith.constant 0.000000e+00 : f32
    %10 = vector.broadcast %cst_7 : f32 to vector<192x8xf32>
    %11 = arith.maximumf %9, %10 : vector<192x8xf32>
    %c0_8 = arith.constant 0 : index
    %c0_9 = arith.constant 0 : index
    %12 = vector.load %arg5[%c0_8, %c0_9] : memref<192x8xf32, #tpu.memory_space<vmem>>, vector<192x8xf32>
    tpu.vector_store %arg5[%c0_8, %c0_9], %11 {strides = array<i32>} : memref<192x8xf32, #tpu.memory_space<vmem>>, vector<192x8xf32>,
    return
  }
  func.func @transform_0(%arg0: i32) -> (i32, i32) {
    %c0_i32 = arith.constant 0 : i32
    %c0_i32_0 = arith.constant 0 : i32
    return %arg0, %c0_i32 : i32, i32
  }
  func.func @transform_1(%arg0: i32) -> (i32, i32) {
    %c0_i32 = arith.constant 0 : i32
    %c0_i32_0 = arith.constant 0 : i32
    %c0_i32_1 = arith.constant 0 : i32
    return %c0_i32, %c0_i32_0 : i32, i32
  }
  func.func @transform_2(%arg0: i32) -> (i32, i32) {
    %c0_i32 = arith.constant 0 : i32
    %c0_i32_0 = arith.constant 0 : i32
    %c0_i32_1 = arith.constant 0 : i32
    return %c0_i32, %c0_i32_0 : i32, i32
  }
  func.func @transform_3(%arg0: i32) -> (i32, i32) {
    %c0_i32 = arith.constant 0 : i32
    %c0_i32_0 = arith.constant 0 : i32
    %c0_i32_1 = arith.constant 0 : i32
    return %c0_i32, %c0_i32_0 : i32, i32
  }
  func.func @transform_4(%arg0: i32) -> (i32, i32) {
    %c0_i32 = arith.constant 0 : i32
    %c0_i32_0 = arith.constant 0 : i32
    return %arg0, %c0_i32 : i32, i32
  }
}

</mosaic_0001>

<llo_original>
// kernel: conv2d_block.3
$region0: #{conv2d_block.3}
  #allocation0 [shape = 'u32[]', space=smem, size = 0x4, offset = 0x4, fixed_abs, tag = 'smem constant byte address 0x4 - core index']
  #allocation1 [shape = 'u32[72,128]{1,0:T(1,128)}', space=vmem, size = 0x9000, scoped, tag = 'internal scratch']
  %s0 = inlined_call_operand.vmem [shape: f32[512,4], index: 0, kind: input, shape index: {}]
  %s1 = inlined_call_operand.vmem [shape: bf16[4,8], index: 1, kind: input, shape index: {}]
  %s2 = inlined_call_operand.vmem [shape: f32[1,8], index: 2, kind: input, shape index: {}]
  %s3 = inlined_call_operand.vmem [shape: f32[1,8], index: 3, kind: input, shape index: {}]
  %s4 = inlined_call_operand.vmem [shape: f32[512,8], index: 4, kind: output, shape index: {}]
  %s5 = sld [smem:[#allocation0]]
  $region97: #{conv2d_block.3} parent=0
    _
  %s7 = ssub.s32 1, %s5
  %s8 = scalar_select 0, %s7, %s5
  $region1: #{conv2d_block.3} parent=0
    #allocation2 [shape = 'u8[196608]{0}', space=vmem, size = 0x30000, scoped, tag = 'output window, operand 0']
    loop: start=0, step=1, limit=5
    $region2: #{conv2d_block.3} parent=1 // loop_pre_header
      _
    $region3: #{conv2d_block.3} parent=1 // loop_header
      %s10 = sphi 0, %s14
      %p11 = scmp.ge.s32.totalorder %s10, 5
      %s20 = sphi 0, %s22
      %s23 = sphi 0, %s20
      %s24 = sphi 0, %s23
      %s40 = sphi 0, %s24
      %s44 = sphi 0, %s44
      %s46 = sphi 0, %s44
      %s47 = sphi 0, %s46
      %s61 = sphi 0, %s47
      %s65 = sphi 0, %s65
      %s67 = sphi 0, %s65
      %s68 = sphi 0, %s67
      %s82 = sphi 0, %s68
      %s86 = sphi 0, %s86
      %s88 = sphi 0, %s86
      %s89 = sphi 0, %s88
      %s103 = sphi 0, %s89
      %s109 = sphi 0, %s111
      %s112 = sphi 0, %s109
      %s113 = sphi 0, %s112
      %s129 = sphi 0, %s113
    $region4: #{conv2d_block.3} parent=1 // loop_header_branch
      %13 = sbr.rel (%p11) target = $region8
    $region5: #{conv2d_block.3} parent=1 // loop_body
      %s15 = ssub.s32 %s10, 1
      %s16 = ssub.s32 %s10, 2
      %s17 = sadd.s32 %s10, 1
      %s18 = ssub.s32 %s10, %s17
      %p19 = scmp.eq.s32.totalorder %s18, 0
      %s21 = sadd.s32 %s20, 1
      %s22 = scalar_select %p19, %s20, %s21
      %p25 = pneg %p19
      %p26 = scmp.eq.s32.totalorder %s10, 2
      %p27 = por %p25, %p26
      %p28 = scmp.ne.s32.totalorder %s20, %s23
      %p29 = scmp.eq.s32.totalorder %s10, 0
      %p30 = por %p28, %p29
      %p31 = scmp.ne.s32.totalorder %s20, %s23
      %p32 = scmp.eq.s32.totalorder %s15, 2
      %p33 = por %p31, %p32
      %p34 = scmp.ne.s32.totalorder %s23, %s24
      %p35 = scmp.eq.s32.totalorder %s15, 0
      %p36 = por %p34, %p35
      %p37 = scmp.ne.s32.totalorder %s23, %s24
      %p38 = scmp.eq.s32.totalorder %s16, 2
      %p39 = por %p37, %p38
      %p41 = scmp.ne.s32.totalorder %s24, %s40
      %p42 = scmp.eq.s32.totalorder %s16, 0
      %p43 = por %p41, %p42
      %s45 = sadd.s32 %s44, 1
      %p48 = scmp.eq.s32.totalorder %s10, 2
      %p49 = scmp.ne.s32.totalorder %s44, %s46
      %p50 = scmp.eq.s32.totalorder %s10, 0
      %p51 = por %p49, %p50
      %p52 = scmp.ne.s32.totalorder %s44, %s46
      %p53 = scmp.eq.s32.totalorder %s15, 2
      %p54 = por %p52, %p53
      %p55 = scmp.ne.s32.totalorder %s46, %s47
      %p56 = scmp.eq.s32.totalorder %s15, 0
      %p57 = por %p55, %p56
      %p58 = scmp.ne.s32.totalorder %s46, %s47
      %p59 = scmp.eq.s32.totalorder %s16, 2
      %p60 = por %p58, %p59
      %p62 = scmp.ne.s32.totalorder %s47, %s61
      %p63 = scmp.eq.s32.totalorder %s16, 0
      %p64 = por %p62, %p63
      %s66 = sadd.s32 %s65, 1
      %p69 = scmp.eq.s32.totalorder %s10, 2
      %p70 = scmp.ne.s32.totalorder %s65, %s67
      %p71 = scmp.eq.s32.totalorder %s10, 0
      %p72 = por %p70, %p71
      %p73 = scmp.ne.s32.totalorder %s65, %s67
      %p74 = scmp.eq.s32.totalorder %s15, 2
      %p75 = por %p73, %p74
      %p76 = scmp.ne.s32.totalorder %s67, %s68
      %p77 = scmp.eq.s32.totalorder %s15, 0
      %p78 = por %p76, %p77
      %p79 = scmp.ne.s32.totalorder %s67, %s68
      %p80 = scmp.eq.s32.totalorder %s16, 2
      %p81 = por %p79, %p80
      %p83 = scmp.ne.s32.totalorder %s68, %s82
      %p84 = scmp.eq.s32.totalorder %s16, 0
      %p85 = por %p83, %p84
      %s87 = sadd.s32 %s86, 1
      %p90 = scmp.eq.s32.totalorder %s10, 2
      %p91 = scmp.ne.s32.totalorder %s86, %s88
      %p92 = scmp.eq.s32.totalorder %s10, 0
      %p93 = por %p91, %p92
      %p94 = scmp.ne.s32.totalorder %s86, %s88
      %p95 = scmp.eq.s32.totalorder %s15, 2
      %p96 = por %p94, %p95
      %p97 = scmp.ne.s32.totalorder %s88, %s89
      %p98 = scmp.eq.s32.totalorder %s15, 0
      %p99 = por %p97, %p98
      %p100 = scmp.ne.s32.totalorder %s88, %s89
      %p101 = scmp.eq.s32.totalorder %s16, 2
      %p102 = por %p100, %p101
      %p104 = scmp.ne.s32.totalorder %s89, %s103
      %p105 = scmp.eq.s32.totalorder %s16, 0
      %p106 = por %p104, %p105
      %s107 = ssub.s32 %s10, %s17
      %p108 = scmp.eq.s32.totalorder %s107, 0
      %s110 = sadd.s32 %s109, 1
      %s111 = scalar_select %p108, %s109, %s110
      %p114 = pneg %p108
      %p115 = scmp.eq.s32.totalorder %s10, 2
      %p116 = por %p114, %p115
      %p117 = scmp.ne.s32.totalorder %s109, %s112
      %p118 = scmp.eq.s32.totalorder %s10, 0
      %p119 = por %p117, %p118
      %p120 = scmp.ne.s32.totalorder %s109, %s112
      %p121 = scmp.eq.s32.totalorder %s15, 2
      %p122 = por %p120, %p121
      %p123 = scmp.ne.s32.totalorder %s112, %s113
      %p124 = scmp.eq.s32.totalorder %s15, 0
      %p125 = por %p123, %p124
      %p126 = scmp.ne.s32.totalorder %s112, %s113
      %p127 = scmp.eq.s32.totalorder %s16, 2
      %p128 = por %p126, %p127
      %p130 = scmp.ne.s32.totalorder %s113, %s129
      %p131 = scmp.eq.s32.totalorder %s16, 0
      %p132 = por %p130, %p131
      %p133 = scmp.le.s32.totalorder 1, %s10
      %p134 = scmp.lt.s32.totalorder %s10, 4
      %p135 = pnand %p133, %p134
      %p136 = pneg %p135
      // Predicated region
      $region9: #{conv2d_block.3} parent=5 // pred_check
        _
      $region10: #{conv2d_block.3} parent=5 // pred_check_branch
        %138 = sbr.rel (%p135) target = $region12
      $region11: #{conv2d_block.3} parent=5 // pred_region
        %s139 = ssub.s32 %s10, 1
        // Predicated region
        $region13: #{conv2d_block.3} parent=11 // pred_check
          %p140 = pneg %p57
        $region14: #{conv2d_block.3} parent=11 // pred_check_branch
          %142 = sbr.rel (%p140) target = $region16
        $region15: #{conv2d_block.3} parent=11 // pred_region
          _
        $region16: #{conv2d_block.3} parent=11 // pred_fallthru
          _
        // Predicated region
        $region17: #{conv2d_block.3} parent=11 // pred_check
          %p143 = pneg %p78
        $region18: #{conv2d_block.3} parent=11 // pred_check_branch
          %145 = sbr.rel (%p143) target = $region20
        $region19: #{conv2d_block.3} parent=11 // pred_region
          _
        $region20: #{conv2d_block.3} parent=11 // pred_fallthru
          _
        // Predicated region
        $region21: #{conv2d_block.3} parent=11 // pred_check
          %p146 = pneg %p99
        $region22: #{conv2d_block.3} parent=11 // pred_check_branch
          %148 = sbr.rel (%p146) target = $region24
        $region23: #{conv2d_block.3} parent=11 // pred_region
          _
        $region24: #{conv2d_block.3} parent=11 // pred_fallthru
          _
      $region12: #{conv2d_block.3} parent=5 // pred_fallthru
        _
      %p149 = scmp.lt.s32.totalorder %s10, 3
      // Predicated region
      $region25: #{conv2d_block.3} parent=5 // pred_check
        %p150 = pneg %p149
      $region26: #{conv2d_block.3} parent=5 // pred_check_branch
        %152 = sbr.rel (%p150) target = $region28
      $region27: #{conv2d_block.3} parent=5 // pred_region
        // Predicated region
        $region29: #{conv2d_block.3} parent=27 // pred_check
          %p153 = pneg %p30
        $region30: #{conv2d_block.3} parent=27 // pred_check_branch
          %155 = sbr.rel (%p153) target = $region32
        $region31: #{conv2d_block.3} parent=27 // pred_region
          %s156 = smul.u32 24, %s10
          %s157 = ssub.s32 64, %s156
          %p158 = scmp.lt.s32.totalorder %s157, 24
          %s159 = scalar_select %p158, %s157, 24
          %s160 = smul.u32 8, %s159
          %p161 = scmp.lt.s32.totalorder %s156, 63
          %s162 = scalar_select %p161, %s156, 63
          %s163 = smul.addr %s162, 8
          %s164 = scalar_lea.vmem %s0, %s163
          %s165 = smul.u32 24, %s10
          %s166 = ssub.s32 64, %s165
          %p167 = scmp.lt.s32.totalorder %s166, 24
          %s168 = scalar_select %p167, %s166, 24
          %s169 = smul.u32 8, %s168
        $region32: #{conv2d_block.3} parent=27 // pred_fallthru
          _
      $region28: #{conv2d_block.3} parent=5 // pred_fallthru
        _
      %p170 = scmp.le.s32.totalorder 1, %s10
      %p171 = scmp.lt.s32.totalorder %s10, 4
      %p172 = pnand %p170, %p171
      %p173 = pneg %p172
      // Predicated region
      $region33: #{conv2d_block.3} parent=5 // pred_check
        _
      $region34: #{conv2d_block.3} parent=5 // pred_check_branch
        %175 = sbr.rel (%p172) target = $region36
      $region35: #{conv2d_block.3} parent=5 // pred_region
        %s176 = ssub.s32 %s10, 1
        %s177 = smul.u32 24, %s15
        %s178 = ssub.s32 64, %s177
        %p179 = scmp.lt.s32.totalorder %s178, 24
        %s180 = scalar_select %p179, %s178, 24
        %s181 = smul.u32 8, %s180
        %p182 = scmp.lt.s32.totalorder %s177, 63
        %s183 = scalar_select %p182, %s177, 63
        %s184 = smul.addr %s183, 8
        %s185 = scalar_lea.vmem %s0, %s184
        %p186 = pneg %p36
        %p187 = pneg %p33
        %p188 = pneg %p57
        %p189 = pneg %p54
        %p190 = pneg %p78
        %p191 = pneg %p75
        %p192 = pneg %p99
        %p193 = pneg %p96
        %p194 = pneg %p125
        %p195 = pneg %p122
        %s196 = sand.u32 %s112, 1
        %s197 = sand.u32 %s112, 1
        %s198 = smul.addr %s197, 192
        %s199 = scalar_lea.vmem [#allocation2], %s198
        %s200 = smul.u32 24, %s15
        %s201 = ssub.s32 64, %s200
        %p202 = scmp.lt.s32.totalorder %s201, 24
        %s203 = scalar_select %p202, %s201, 24
        %s204 = smul.u32 8, %s203
        %p205 = scmp.lt.s32.totalorder %s200, 63
        %s206 = scalar_select %p205, %s200, 63
        %s207 = smul.addr %s206, 8
        %s208 = scalar_lea.vmem %s0, %s207
        %s209 = smul.u32 24, %s15
        %s210 = ssub.s32 64, %s209
        %p211 = scmp.lt.s32.totalorder %s210, 24
        %s212 = scalar_select %p211, %s210, 24
        %s213 = smul.u32 8, %s212
        %s214 = smul.u32 24, %s15
        %s215 = ssub.s32 64, %s214
        %p216 = scmp.lt.s32.totalorder %s215, 24
        %s217 = scalar_select %p216, %s215, 24
        %s218 = smul.u32 8, %s217
        %v220 = vld [vmem:[%s208] sm:$0xff]
        %v221 = vld [vmem:[%s208 + $0x8] sm:$0xff]
        %v222 = vld [vmem:[%s208 + $0x10] sm:$0xff]
        %v223 = vld [vmem:[%s208 + $0x18] sm:$0xff]
        %v224 = vld [vmem:[%s208 + $0x20] sm:$0xff]
        %v225 = vld [vmem:[%s208 + $0x28] sm:$0xff]
        %v226 = vld [vmem:[%s208 + $0x30] sm:$0xff]
        %v227 = vld [vmem:[%s208 + $0x38] sm:$0xff]
        %v228 = vld [vmem:[%s208 + $0x40] sm:$0xff]
        %v229 = vld [vmem:[%s208 + $0x48] sm:$0xff]
        %v230 = vld [vmem:[%s208 + $0x50] sm:$0xff]
        %v231 = vld [vmem:[%s208 + $0x58] sm:$0xff]
        %v232 = vld [vmem:[%s208 + $0x60] sm:$0xff]
        %v233 = vld [vmem:[%s208 + $0x68] sm:$0xff]
        %v234 = vld [vmem:[%s208 + $0x70] sm:$0xff]
        %v235 = vld [vmem:[%s208 + $0x78] sm:$0xff]
        %v236 = vld [vmem:[%s208 + $0x80] sm:$0xff]
        %v237 = vld [vmem:[%s208 + $0x88] sm:$0xff]
        %v238 = vld [vmem:[%s208 + $0x90] sm:$0xff]
        %v239 = vld [vmem:[%s208 + $0x98] sm:$0xff]
        %v240 = vld [vmem:[%s208 + $0xa0] sm:$0xff]
        %v241 = vld [vmem:[%s208 + $0xa8] sm:$0xff]
        %v242 = vld [vmem:[%s208 + $0xb0] sm:$0xff]
        %v243 = vld [vmem:[%s208 + $0xb8] sm:$0xff]
        %v244 = vpack.c.bf16 %v221, %v220
        %v245 = vpack.c.bf16 %v223, %v222
        %v246 = vpack.c.bf16 %v225, %v224
        %v247 = vpack.c.bf16 %v227, %v226
        %v248 = vpack.c.bf16 %v229, %v228
        %v249 = vpack.c.bf16 %v231, %v230
        %v250 = vpack.c.bf16 %v233, %v232
        %v251 = vpack.c.bf16 %v235, %v234
        %v252 = vpack.c.bf16 %v237, %v236
        %v253 = vpack.c.bf16 %v239, %v238
        %v254 = vpack.c.bf16 %v241, %v240
        %v255 = vpack.c.bf16 %v243, %v242
        %v256 = vld [vmem:[%s1] sm:$0x3]
        %vm257 = vcmask 31744
        %v259 = vsel %vm257, %v244, 0
        %v262 = vsel %vm257, %v245, 0
        %v265 = vsel %vm257, %v246, 0
        %v268 = vsel %vm257, %v247, 0
        %v271 = vsel %vm257, %v248, 0
        %v274 = vsel %vm257, %v249, 0
        %v277 = vsel %vm257, %v250, 0
        %v280 = vsel %vm257, %v251, 0
        %v283 = vsel %vm257, %v252, 0
        %v286 = vsel %vm257, %v253, 0
        %v289 = vsel %vm257, %v254, 0
        %v292 = vsel %vm257, %v255, 0
        %vm294 = vcmask 1041408
        %v296 = vsel %vm294, %v256, 0
        %298 = vmatpush.bf16.msra.mxu0 0
        %299 = vmatpush.bf16.msra.mxu0 0
        %300 = vmatpush.bf16.msra.mxu0 0
        %301 = vmatpush.bf16.msra.mxu0 0
        %302 = vmatpush.bf16.msra.mxu0 0
        %303 = vmatpush.bf16.msra.mxu0 0
        %304 = vmatpush.bf16.msra.mxu0 0
        %305 = vmatpush.bf16.msra.mxu0 %v296
        %306 = vmatmul.bf16.gmra.mxu0 %v259
        %v307 = vpop.f32.mrf.mxu0
        %v308 = vadd.f32 0.0, %v307
        %v309 = vpop.f32.mrf.mxu0
        %v310 = vadd.f32 0.0, %v309
        %311 = vmatmul.bf16.gmra.mxu0 %v262
        %v312 = vpop.f32.mrf.mxu0
        %v313 = vadd.f32 0.0, %v312
        %v314 = vpop.f32.mrf.mxu0
        %v315 = vadd.f32 0.0, %v314
        %316 = vmatmul.bf16.gmra.mxu0 %v265
        %v317 = vpop.f32.mrf.mxu0
        %v318 = vadd.f32 0.0, %v317
        %v319 = vpop.f32.mrf.mxu0
        %v320 = vadd.f32 0.0, %v319
        %321 = vmatmul.bf16.gmra.mxu0 %v268
        %v322 = vpop.f32.mrf.mxu0
        %v323 = vadd.f32 0.0, %v322
        %v324 = vpop.f32.mrf.mxu0
        %v325 = vadd.f32 0.0, %v324
        %326 = vmatmul.bf16.gmra.mxu0 %v271
        %v327 = vpop.f32.mrf.mxu0
        %v328 = vadd.f32 0.0, %v327
        %v329 = vpop.f32.mrf.mxu0
        %v330 = vadd.f32 0.0, %v329
        %331 = vmatmul.bf16.gmra.mxu0 %v274
        %v332 = vpop.f32.mrf.mxu0
        %v333 = vadd.f32 0.0, %v332
        %v334 = vpop.f32.mrf.mxu0
        %v335 = vadd.f32 0.0, %v334
        %336 = vmatmul.bf16.gmra.mxu0 %v277
        %v337 = vpop.f32.mrf.mxu0
        %v338 = vadd.f32 0.0, %v337
        %v339 = vpop.f32.mrf.mxu0
        %v340 = vadd.f32 0.0, %v339
        %341 = vmatmul.bf16.gmra.mxu0 %v280
        %v342 = vpop.f32.mrf.mxu0
        %v343 = vadd.f32 0.0, %v342
        %v344 = vpop.f32.mrf.mxu0
        %v345 = vadd.f32 0.0, %v344
        %346 = vmatmul.bf16.gmra.mxu0 %v283
        %v347 = vpop.f32.mrf.mxu0
        %v348 = vadd.f32 0.0, %v347
        %v349 = vpop.f32.mrf.mxu0
        %v350 = vadd.f32 0.0, %v349
        %351 = vmatmul.bf16.gmra.mxu0 %v286
        %v352 = vpop.f32.mrf.mxu0
        %v353 = vadd.f32 0.0, %v352
        %v354 = vpop.f32.mrf.mxu0
        %v355 = vadd.f32 0.0, %v354
        %356 = vmatmul.bf16.gmra.mxu0 %v289
        %v357 = vpop.f32.mrf.mxu0
        %v358 = vadd.f32 0.0, %v357
        %v359 = vpop.f32.mrf.mxu0
        %v360 = vadd.f32 0.0, %v359
        %361 = vmatmul.bf16.gmra.mxu0 %v292
        %v362 = vpop.f32.mrf.mxu0
        %v363 = vadd.f32 0.0, %v362
        %v364 = vpop.f32.mrf.mxu0
        %v365 = vadd.f32 0.0, %v364
        %366 = vdwg.mxu0
        %v367 = vld [vmem:[%s2] sm:$0x1]
        %v369 = vperm.slane %v367, 0
        %v371 = vmul.f32 %v308, %v369
        %v372 = vmul.f32 %v310, %v369
        %v373 = vmul.f32 %v313, %v369
        %v374 = vmul.f32 %v315, %v369
        %v375 = vmul.f32 %v318, %v369
        %v376 = vmul.f32 %v320, %v369
        %v377 = vmul.f32 %v323, %v369
        %v378 = vmul.f32 %v325, %v369
        %v379 = vmul.f32 %v328, %v369
        %v380 = vmul.f32 %v330, %v369
        %v381 = vmul.f32 %v333, %v369
        %v382 = vmul.f32 %v335, %v369
        %v383 = vmul.f32 %v338, %v369
        %v384 = vmul.f32 %v340, %v369
        %v385 = vmul.f32 %v343, %v369
        %v386 = vmul.f32 %v345, %v369
        %v387 = vmul.f32 %v348, %v369
        %v388 = vmul.f32 %v350, %v369
        %v389 = vmul.f32 %v353, %v369
        %v390 = vmul.f32 %v355, %v369
        %v391 = vmul.f32 %v358, %v369
        %v392 = vmul.f32 %v360, %v369
        %v393 = vmul.f32 %v363, %v369
        %v394 = vmul.f32 %v365, %v369
        %v395 = vld [vmem:[%s3] sm:$0x1]
        %v397 = vperm.slane %v395, 0
        %v399 = vadd.f32 %v371, %v397
        %v400 = vadd.f32 %v372, %v397
        %v401 = vadd.f32 %v373, %v397
        %v402 = vadd.f32 %v374, %v397
        %v403 = vadd.f32 %v375, %v397
        %v404 = vadd.f32 %v376, %v397
        %v405 = vadd.f32 %v377, %v397
        %v406 = vadd.f32 %v378, %v397
        %v407 = vadd.f32 %v379, %v397
        %v408 = vadd.f32 %v380, %v397
        %v409 = vadd.f32 %v381, %v397
        %v410 = vadd.f32 %v382, %v397
        %v411 = vadd.f32 %v383, %v397
        %v412 = vadd.f32 %v384, %v397
        %v413 = vadd.f32 %v385, %v397
        %v414 = vadd.f32 %v386, %v397
        %v415 = vadd.f32 %v387, %v397
        %v416 = vadd.f32 %v388, %v397
        %v417 = vadd.f32 %v389, %v397
        %v418 = vadd.f32 %v390, %v397
        %v419 = vadd.f32 %v391, %v397
        %v420 = vadd.f32 %v392, %v397
        %v421 = vadd.f32 %v393, %v397
        %v422 = vadd.f32 %v394, %v397
        %v423 = vmax.f32 %v399, 0.0
        %v424 = vmax.f32 %v400, 0.0
        %v425 = vmax.f32 %v401, 0.0
        %v426 = vmax.f32 %v402, 0.0
        %v427 = vmax.f32 %v403, 0.0
        %v428 = vmax.f32 %v404, 0.0
        %v429 = vmax.f32 %v405, 0.0
        %v430 = vmax.f32 %v406, 0.0
        %v431 = vmax.f32 %v407, 0.0
        %v432 = vmax.f32 %v408, 0.0
        %v433 = vmax.f32 %v409, 0.0
        %v434 = vmax.f32 %v410, 0.0
        %v435 = vmax.f32 %v411, 0.0
        %v436 = vmax.f32 %v412, 0.0
        %v437 = vmax.f32 %v413, 0.0
        %v438 = vmax.f32 %v414, 0.0
        %v439 = vmax.f32 %v415, 0.0
        %v440 = vmax.f32 %v416, 0.0
        %v441 = vmax.f32 %v417, 0.0
        %v442 = vmax.f32 %v418, 0.0
        %v443 = vmax.f32 %v419, 0.0
        %v444 = vmax.f32 %v420, 0.0
        %v445 = vmax.f32 %v421, 0.0
        %v446 = vmax.f32 %v422, 0.0
        %vm447 = vcmask 64512
        %448 = vst.msk [vmem:[%s199] sm:$0xff] %vm447, %v423
        %449 = vst.msk [vmem:[%s199 + $0x8] sm:$0xff] %vm447, %v424
        %450 = vst.msk [vmem:[%s199 + $0x10] sm:$0xff] %vm447, %v425
        %451 = vst.msk [vmem:[%s199 + $0x18] sm:$0xff] %vm447, %v426
        %452 = vst.msk [vmem:[%s199 + $0x20] sm:$0xff] %vm447, %v427
        %453 = vst.msk [vmem:[%s199 + $0x28] sm:$0xff] %vm447, %v428
        %454 = vst.msk [vmem:[%s199 + $0x30] sm:$0xff] %vm447, %v429
        %455 = vst.msk [vmem:[%s199 + $0x38] sm:$0xff] %vm447, %v430
        %456 = vst.msk [vmem:[%s199 + $0x40] sm:$0xff] %vm447, %v431
        %457 = vst.msk [vmem:[%s199 + $0x48] sm:$0xff] %vm447, %v432
        %458 = vst.msk [vmem:[%s199 + $0x50] sm:$0xff] %vm447, %v433
        %459 = vst.msk [vmem:[%s199 + $0x58] sm:$0xff] %vm447, %v434
        %460 = vst.msk [vmem:[%s199 + $0x60] sm:$0xff] %vm447, %v435
        %461 = vst.msk [vmem:[%s199 + $0x68] sm:$0xff] %vm447, %v436
        %462 = vst.msk [vmem:[%s199 + $0x70] sm:$0xff] %vm447, %v437
        %463 = vst.msk [vmem:[%s199 + $0x78] sm:$0xff] %vm447, %v438
        %464 = vst.msk [vmem:[%s199 + $0x80] sm:$0xff] %vm447, %v439
        %465 = vst.msk [vmem:[%s199 + $0x88] sm:$0xff] %vm447, %v440
        %466 = vst.msk [vmem:[%s199 + $0x90] sm:$0xff] %vm447, %v441
        %467 = vst.msk [vmem:[%s199 + $0x98] sm:$0xff] %vm447, %v442
        %468 = vst.msk [vmem:[%s199 + $0xa0] sm:$0xff] %vm447, %v443
        %469 = vst.msk [vmem:[%s199 + $0xa8] sm:$0xff] %vm447, %v444
        %470 = vst.msk [vmem:[%s199 + $0xb0] sm:$0xff] %vm447, %v445
        %471 = vst.msk [vmem:[%s199 + $0xb8] sm:$0xff] %vm447, %v446
        %s472 = sand.u32 %s112, 1
        %s473 = sand.u32 %s112, 1
        %s474 = smul.addr %s473, 192
        %s475 = scalar_lea.vmem [#allocation2], %s474
        // Predicated region
        $region37: #{conv2d_block.3} parent=35 // pred_check
          %p476 = pneg %p122
        $region38: #{conv2d_block.3} parent=35 // pred_check_branch
          %478 = sbr.rel (%p476) target = $region40
        $region39: #{conv2d_block.3} parent=35 // pred_region
          %s479 = smul.u32 24, %s15
          %s480 = ssub.s32 64, %s479
          %p481 = scmp.lt.s32.totalorder %s480, 24
          %s482 = scalar_select %p481, %s480, 24
          %s483 = smul.u32 8, %s482
          %p484 = scmp.ne.s32.totalorder 0, %s483
          %s485 = smul.addr %s479, 8
          %s486 = scalar_lea.vmem %s4, %s485
          // Predicated region
          $region41: #{conv2d_block.3} parent=39 // pred_check
            %p487 = pneg %p484
          $region42: #{conv2d_block.3} parent=39 // pred_check_branch
            %489 = sbr.rel (%p487) target = $region44
          $region43: #{conv2d_block.3} parent=39 // pred_region
            // Predicated region
            $region45: #{conv2d_block.3} parent=43 // pred_check
              _
            $region46: #{conv2d_block.3} parent=43 // pred_check_branch
              %491 = sbr.rel (0) target = $region48
            $region47: #{conv2d_block.3} parent=43 // pred_region
              // Predicated region
              $region67: #{conv2d_block.3} parent=47 // pred_check
                _
              $region68: #{conv2d_block.3} parent=47 // pred_check_branch
                %588 = sbr.rel (0) target = $region70
              $region69: #{conv2d_block.3} parent=47 // pred_region
                %s589 = sdiv.u32.pop %s482, 24
                %s590 = srem.u32.pop %s482, 24
                // While loop
                $region71: #{conv2d_block.3} parent=69 // loop_pre_header
                  _
                $region72: #{conv2d_block.3} parent=69 // loop_header
                  %s592 = sphi 0, %s594
                  %p593 = scmp.ge.s32.totalorder %s592, %s589
                  %s597 = sphi 0, %s650
                  %s598 = sphi %s475, %s653
                  %s599 = sphi %s486, %s654
                $region73: #{conv2d_block.3} parent=69 // loop_header_branch
                  %596 = sbr.rel (%p593) target = $region77
                $region74: #{conv2d_block.3} parent=69 // loop_body
                  %v600 = vld [vmem:[%s598] sm:$0xff]
                  %601 = vst [vmem:[%s599] sm:$0xff] %v600
                  %v602 = vld [vmem:[%s598 + $0x8] sm:$0xff]
                  %603 = vst [vmem:[%s599 + $0x8] sm:$0xff] %v602
                  %v604 = vld [vmem:[%s598 + $0x10] sm:$0xff]
                  %605 = vst [vmem:[%s599 + $0x10] sm:$0xff] %v604
                  %v606 = vld [vmem:[%s598 + $0x18] sm:$0xff]
                  %607 = vst [vmem:[%s599 + $0x18] sm:$0xff] %v606
                  %v608 = vld [vmem:[%s598 + $0x20] sm:$0xff]
                  %609 = vst [vmem:[%s599 + $0x20] sm:$0xff] %v608
                  %v610 = vld [vmem:[%s598 + $0x28] sm:$0xff]
                  %611 = vst [vmem:[%s599 + $0x28] sm:$0xff] %v610
                  %v612 = vld [vmem:[%s598 + $0x30] sm:$0xff]
                  %613 = vst [vmem:[%s599 + $0x30] sm:$0xff] %v612
                  %v614 = vld [vmem:[%s598 + $0x38] sm:$0xff]
                  %615 = vst [vmem:[%s599 + $0x38] sm:$0xff] %v614
                  %v616 = vld [vmem:[%s598 + $0x40] sm:$0xff]
                  %617 = vst [vmem:[%s599 + $0x40] sm:$0xff] %v616
                  %v618 = vld [vmem:[%s598 + $0x48] sm:$0xff]
                  %619 = vst [vmem:[%s599 + $0x48] sm:$0xff] %v618
                  %v620 = vld [vmem:[%s598 + $0x50] sm:$0xff]
                  %621 = vst [vmem:[%s599 + $0x50] sm:$0xff] %v620
                  %v622 = vld [vmem:[%s598 + $0x58] sm:$0xff]
                  %623 = vst [vmem:[%s599 + $0x58] sm:$0xff] %v622
                  %v624 = vld [vmem:[%s598 + $0x60] sm:$0xff]
                  %625 = vst [vmem:[%s599 + $0x60] sm:$0xff] %v624
                  %v626 = vld [vmem:[%s598 + $0x68] sm:$0xff]
                  %627 = vst [vmem:[%s599 + $0x68] sm:$0xff] %v626
                  %v628 = vld [vmem:[%s598 + $0x70] sm:$0xff]
                  %629 = vst [vmem:[%s599 + $0x70] sm:$0xff] %v628
                  %v630 = vld [vmem:[%s598 + $0x78] sm:$0xff]
                  %631 = vst [vmem:[%s599 + $0x78] sm:$0xff] %v630
                  %v632 = vld [vmem:[%s598 + $0x80] sm:$0xff]
                  %633 = vst [vmem:[%s599 + $0x80] sm:$0xff] %v632
                  %v634 = vld [vmem:[%s598 + $0x88] sm:$0xff]
                  %635 = vst [vmem:[%s599 + $0x88] sm:$0xff] %v634
                  %v636 = vld [vmem:[%s598 + $0x90] sm:$0xff]
                  %637 = vst [vmem:[%s599 + $0x90] sm:$0xff] %v636
                  %v638 = vld [vmem:[%s598 + $0x98] sm:$0xff]
                  %639 = vst [vmem:[%s599 + $0x98] sm:$0xff] %v638
                  %v640 = vld [vmem:[%s598 + $0xa0] sm:$0xff]
                  %641 = vst [vmem:[%s599 + $0xa0] sm:$0xff] %v640
                  %v642 = vld [vmem:[%s598 + $0xa8] sm:$0xff]
                  %643 = vst [vmem:[%s599 + $0xa8] sm:$0xff] %v642
                  %v644 = vld [vmem:[%s598 + $0xb0] sm:$0xff]
                  %645 = vst [vmem:[%s599 + $0xb0] sm:$0xff] %v644
                  %v646 = vld [vmem:[%s598 + $0xb8] sm:$0xff]
                  %647 = vst [vmem:[%s599 + $0xb8] sm:$0xff] %v646
                  %s648 = sadd.s32 1, %s597
                  %p649 = scmp.ge.s32.totalorder %s648, %s589
                  %s650 = scalar_select %p649, 0, %s648
                  %s651 = smul.u32 %s650, 192
                  %s652 = smul.u32 %s650, 192
                  %s653 = scalar_lea.vmem %s475, %s651 [#allocation2]
                  %s654 = scalar_lea.vmem %s486, %s652
                $region75: #{conv2d_block.3} parent=69 // loop_footer
                  %s594 = sadd.s32 %s592, 1
                $region76: #{conv2d_block.3} parent=69 // loop_footer_branch
                  %591 = sbr.rel target = $region72
                $region77: #{conv2d_block.3} parent=69 // loop_exit
                  _
                %s655 = sdiv.u32.pop %s482, 24
                %s656 = srem.u32.pop %s482, 24
                %s657 = smul.u32 %s655, 24
                %s658 = smul.u32 8, %s657
                %s659 = scalar_lea.vmem %s475, %s658 [#allocation2]
                %s660 = smul.u32 8, %s657
                %s661 = scalar_lea.vmem %s486, %s660
                // While loop
                $region78: #{conv2d_block.3} parent=69 // loop_pre_header
                  _
                $region79: #{conv2d_block.3} parent=69 // loop_header
                  %s663 = sphi 0, %s665
                  %p664 = scmp.ge.s32.totalorder %s663, %s656
                  %s668 = sphi 0, %s675
                  %s669 = sphi %s659, %s678
                  %s670 = sphi %s661, %s679
                $region80: #{conv2d_block.3} parent=69 // loop_header_branch
                  %667 = sbr.rel (%p664) target = $region84
                $region81: #{conv2d_block.3} parent=69 // loop_body
                  %v671 = vld [vmem:[%s669] sm:$0xff]
                  %672 = vst [vmem:[%s670] sm:$0xff] %v671
                  %s673 = sadd.s32 1, %s668
                  %p674 = scmp.ge.s32.totalorder %s673, %s656
                  %s675 = scalar_select %p674, 0, %s673
                  %s676 = smul.u32 %s675, 8
                  %s677 = smul.u32 %s675, 8
                  %s678 = scalar_lea.vmem %s659, %s676 [#allocation2]
                  %s679 = scalar_lea.vmem %s661, %s677
                $region82: #{conv2d_block.3} parent=69 // loop_footer
                  %s665 = sadd.s32 %s663, 1
                $region83: #{conv2d_block.3} parent=69 // loop_footer_branch
                  %662 = sbr.rel target = $region79
                $region84: #{conv2d_block.3} parent=69 // loop_exit
                  _
              $region70: #{conv2d_block.3} parent=47 // pred_fallthru
                _
              // Predicated region
              $region85: #{conv2d_block.3} parent=47 // pred_check
                _
              $region86: #{conv2d_block.3} parent=47 // pred_check_branch
                %681 = sbr.rel target = $region88
              $region87: #{conv2d_block.3} parent=47 // pred_region
                _
              $region88: #{conv2d_block.3} parent=47 // pred_fallthru
                _
            $region48: #{conv2d_block.3} parent=43 // pred_fallthru
              _
            // Predicated region
            $region49: #{conv2d_block.3} parent=43 // pred_check
              _
            $region50: #{conv2d_block.3} parent=43 // pred_check_branch
              %493 = sbr.rel target = $region52
            $region51: #{conv2d_block.3} parent=43 // pred_region
              %s495 = ssub.s32 256, 1
              %s496 = sdiv.u32.pop %s482, 24
              %s497 = srem.u32.pop %s482, 24
              // While loop
              $region53: #{conv2d_block.3} parent=51 // loop_pre_header
                _
              $region54: #{conv2d_block.3} parent=51 // loop_header
                %s499 = sphi 0, %s501
                %p500 = scmp.ge.s32.totalorder %s499, %s496
                %s504 = sphi 0, %s557
                %s505 = sphi %s475, %s560
                %s506 = sphi %s486, %s561
              $region55: #{conv2d_block.3} parent=51 // loop_header_branch
                %503 = sbr.rel (%p500) target = $region59
              $region56: #{conv2d_block.3} parent=51 // loop_body
                %v507 = vld [vmem:[%s505] sm:%s495]
                %508 = vst [vmem:[%s506] sm:%s495] %v507
                %v509 = vld [vmem:[%s505 + $0x8] sm:%s495]
                %510 = vst [vmem:[%s506 + $0x8] sm:%s495] %v509
                %v511 = vld [vmem:[%s505 + $0x10] sm:%s495]
                %512 = vst [vmem:[%s506 + $0x10] sm:%s495] %v511
                %v513 = vld [vmem:[%s505 + $0x18] sm:%s495]
                %514 = vst [vmem:[%s506 + $0x18] sm:%s495] %v513
                %v515 = vld [vmem:[%s505 + $0x20] sm:%s495]
                %516 = vst [vmem:[%s506 + $0x20] sm:%s495] %v515
                %v517 = vld [vmem:[%s505 + $0x28] sm:%s495]
                %518 = vst [vmem:[%s506 + $0x28] sm:%s495] %v517
                %v519 = vld [vmem:[%s505 + $0x30] sm:%s495]
                %520 = vst [vmem:[%s506 + $0x30] sm:%s495] %v519
                %v521 = vld [vmem:[%s505 + $0x38] sm:%s495]
                %522 = vst [vmem:[%s506 + $0x38] sm:%s495] %v521
                %v523 = vld [vmem:[%s505 + $0x40] sm:%s495]
                %524 = vst [vmem:[%s506 + $0x40] sm:%s495] %v523
                %v525 = vld [vmem:[%s505 + $0x48] sm:%s495]
                %526 = vst [vmem:[%s506 + $0x48] sm:%s495] %v525
                %v527 = vld [vmem:[%s505 + $0x50] sm:%s495]
                %528 = vst [vmem:[%s506 + $0x50] sm:%s495] %v527
                %v529 = vld [vmem:[%s505 + $0x58] sm:%s495]
                %530 = vst [vmem:[%s506 + $0x58] sm:%s495] %v529
                %v531 = vld [vmem:[%s505 + $0x60] sm:%s495]
                %532 = vst [vmem:[%s506 + $0x60] sm:%s495] %v531
                %v533 = vld [vmem:[%s505 + $0x68] sm:%s495]
                %534 = vst [vmem:[%s506 + $0x68] sm:%s495] %v533
                %v535 = vld [vmem:[%s505 + $0x70] sm:%s495]
                %536 = vst [vmem:[%s506 + $0x70] sm:%s495] %v535
                %v537 = vld [vmem:[%s505 + $0x78] sm:%s495]
                %538 = vst [vmem:[%s506 + $0x78] sm:%s495] %v537
                %v539 = vld [vmem:[%s505 + $0x80] sm:%s495]
                %540 = vst [vmem:[%s506 + $0x80] sm:%s495] %v539
                %v541 = vld [vmem:[%s505 + $0x88] sm:%s495]
                %542 = vst [vmem:[%s506 + $0x88] sm:%s495] %v541
                %v543 = vld [vmem:[%s505 + $0x90] sm:%s495]
                %544 = vst [vmem:[%s506 + $0x90] sm:%s495] %v543
                %v545 = vld [vmem:[%s505 + $0x98] sm:%s495]
                %546 = vst [vmem:[%s506 + $0x98] sm:%s495] %v545
                %v547 = vld [vmem:[%s505 + $0xa0] sm:%s495]
                %548 = vst [vmem:[%s506 + $0xa0] sm:%s495] %v547
                %v549 = vld [vmem:[%s505 + $0xa8] sm:%s495]
                %550 = vst [vmem:[%s506 + $0xa8] sm:%s495] %v549
                %v551 = vld [vmem:[%s505 + $0xb0] sm:%s495]
                %552 = vst [vmem:[%s506 + $0xb0] sm:%s495] %v551
                %v553 = vld [vmem:[%s505 + $0xb8] sm:%s495]
                %554 = vst [vmem:[%s506 + $0xb8] sm:%s495] %v553
                %s555 = sadd.s32 1, %s504
                %p556 = scmp.ge.s32.totalorder %s555, %s496
                %s557 = scalar_select %p556, 0, %s555
                %s558 = smul.u32 %s557, 192
                %s559 = smul.u32 %s557, 192
                %s560 = scalar_lea.vmem %s475, %s558 [#allocation2]
                %s561 = scalar_lea.vmem %s486, %s559
              $region57: #{conv2d_block.3} parent=51 // loop_footer
                %s501 = sadd.s32 %s499, 1
              $region58: #{conv2d_block.3} parent=51 // loop_footer_branch
                %498 = sbr.rel target = $region54
              $region59: #{conv2d_block.3} parent=51 // loop_exit
                _
              %s562 = sdiv.u32.pop %s482, 24
              %s563 = srem.u32.pop %s482, 24
              %s564 = smul.u32 %s562, 24
              %s565 = smul.u32 8, %s564
              %s566 = scalar_lea.vmem %s475, %s565 [#allocation2]
              %s567 = smul.u32 8, %s564
              %s568 = scalar_lea.vmem %s486, %s567
              // While loop
              $region60: #{conv2d_block.3} parent=51 // loop_pre_header
                _
              $region61: #{conv2d_block.3} parent=51 // loop_header
                %s570 = sphi 0, %s572
                %p571 = scmp.ge.s32.totalorder %s570, %s563
                %s575 = sphi 0, %s582
                %s576 = sphi %s566, %s585
                %s577 = sphi %s568, %s586
              $region62: #{conv2d_block.3} parent=51 // loop_header_branch
                %574 = sbr.rel (%p571) target = $region66
              $region63: #{conv2d_block.3} parent=51 // loop_body
                %v578 = vld [vmem:[%s576] sm:%s495]
                %579 = vst [vmem:[%s577] sm:%s495] %v578
                %s580 = sadd.s32 1, %s575
                %p581 = scmp.ge.s32.totalorder %s580, %s563
                %s582 = scalar_select %p581, 0, %s580
                %s583 = smul.u32 %s582, 8
                %s584 = smul.u32 %s582, 8
                %s585 = scalar_lea.vmem %s566, %s583 [#allocation2]
                %s586 = scalar_lea.vmem %s568, %s584
              $region64: #{conv2d_block.3} parent=51 // loop_footer
                %s572 = sadd.s32 %s570, 1
              $region65: #{conv2d_block.3} parent=51 // loop_footer_branch
                %569 = sbr.rel target = $region61
              $region66: #{conv2d_block.3} parent=51 // loop_exit
                _
            $region52: #{conv2d_block.3} parent=43 // pred_fallthru
              _
          $region44: #{conv2d_block.3} parent=39 // pred_fallthru
            _
          %682 = vnop
        $region40: #{conv2d_block.3} parent=35 // pred_fallthru
          _
      $region36: #{conv2d_block.3} parent=5 // pred_fallthru
        _
      %p683 = scmp.le.s32.totalorder 2, %s10
      // Predicated region
      $region89: #{conv2d_block.3} parent=5 // pred_check
        %p684 = pneg %p683
      $region90: #{conv2d_block.3} parent=5 // pred_check_branch
        %686 = sbr.rel (%p684) target = $region92
      $region91: #{conv2d_block.3} parent=5 // pred_region
        %s687 = ssub.s32 %s10, 2
        // Predicated region
        $region93: #{conv2d_block.3} parent=91 // pred_check
          %p688 = pneg %p128
        $region94: #{conv2d_block.3} parent=91 // pred_check_branch
          %690 = sbr.rel (%p688) target = $region96
        $region95: #{conv2d_block.3} parent=91 // pred_region
          %s691 = sand.u32 %s113, 1
          %s692 = sand.u32 %s113, 1
          %s693 = smul.addr %s692, 192
          %s694 = scalar_lea.vmem [#allocation2], %s693
        $region96: #{conv2d_block.3} parent=91 // pred_fallthru
          _
      $region92: #{conv2d_block.3} parent=5 // pred_fallthru
        _
    $region6: #{conv2d_block.3} parent=1 // loop_footer
      %s14 = sadd.s32 1, %s10
    $region7: #{conv2d_block.3} parent=1 // loop_footer_branch
      %9 = sbr.rel target = $region3
    $region8: #{conv2d_block.3} parent=1 // loop_exit
      _

// kernel: conv2d_block.2
$region0: #{conv2d_block.2}
  #allocation0 [shape = 'u32[]', space=smem, size = 0x4, offset = 0x4, fixed_abs, tag = 'smem constant byte address 0x4 - core index']
  #allocation1 [shape = 'u32[72,128]{1,0:T(1,128)}', space=vmem, size = 0x9000, scoped, tag = 'internal scratch']
  %s0 = inlined_call_operand.vmem [shape: f32[512,4], index: 0, kind: input, shape index: {}]
  %s1 = inlined_call_operand.vmem [shape: bf16[4,8], index: 1, kind: input, shape index: {}]
  %s2 = inlined_call_operand.vmem [shape: f32[2,16,8], index: 2, kind: output, shape index: {}]
  %s3 = sld [smem:[#allocation0]]
  $region45: #{conv2d_block.2} parent=0
    _
  %s5 = ssub.s32 1, %s3
  %s6 = scalar_select 0, %s5, %s3
  loop: start=0, step=1, limit=6
  $region2: #{conv2d_block.2} parent=0 // loop_pre_header
    _
  $region3: #{conv2d_block.2} parent=0 // loop_header
    %s8 = sphi 0, %s12
    %p9 = scmp.ge.s32.totalorder %s8, 6
    %s15 = sphi 0, %s27
    %s16 = sphi 0, %s23
    %s17 = sphi 0, %s15
    %s18 = sphi 0, %s16
    %s19 = sphi 0, %s17
    %s20 = sphi 0, %s18
    %s38 = sphi 0, %s40
    %s41 = sphi 0, %s38
    %s42 = sphi 0, %s41
    %s58 = sphi 0, %s42
    %s62 = sphi 0, %s62
    %s64 = sphi 0, %s62
    %s65 = sphi 0, %s64
    %s79 = sphi 0, %s65
    %s85 = sphi 0, %s87
    %s88 = sphi 0, %s85
    %s89 = sphi 0, %s88
    %s105 = sphi 0, %s89
  $region4: #{conv2d_block.2} parent=0 // loop_header_branch
    %11 = sbr.rel (%p9) target = $region8
  $region5: #{conv2d_block.2} parent=0 // loop_body
    %s13 = ssub.s32 %s8, 1
    %s14 = ssub.s32 %s8, 2
    %s21 = sadd.s32 1, %s16
    %p22 = scmp.ge.s32.totalorder %s21, 2
    %s23 = scalar_select %p22, 0, %s21
    %s24 = sadd.s32 1, %s15
    %s25 = scalar_select %p22, %s24, %s15
    %p26 = scmp.ge.s32.totalorder %s25, 2
    %s27 = scalar_select %p26, 0, %s25
    %s28 = smul.u32 %s15, 2
    %s29 = sadd.s32 %s28, %s16
    %p30 = scmp.lt.s32.totalorder %s29, 2
    %s31 = scalar_select %p30, %s29, 2
    %s32 = smul.u32 %s27, 2
    %s33 = sadd.s32 %s32, %s23
    %p34 = scmp.lt.s32.totalorder %s33, 2
    %s35 = scalar_select %p34, %s33, 2
    %s36 = ssub.s32 %s31, %s35
    %p37 = scmp.eq.s32.totalorder %s36, 0
    %s39 = sadd.s32 %s38, 1
    %s40 = scalar_select %p37, %s38, %s39
    %p43 = pneg %p37
    %p44 = scmp.eq.s32.totalorder %s8, 3
    %p45 = por %p43, %p44
    %p46 = scmp.ne.s32.totalorder %s38, %s41
    %p47 = scmp.eq.s32.totalorder %s8, 0
    %p48 = por %p46, %p47
    %p49 = scmp.ne.s32.totalorder %s38, %s41
    %p50 = scmp.eq.s32.totalorder %s13, 3
    %p51 = por %p49, %p50
    %p52 = scmp.ne.s32.totalorder %s41, %s42
    %p53 = scmp.eq.s32.totalorder %s13, 0
    %p54 = por %p52, %p53
    %p55 = scmp.ne.s32.totalorder %s41, %s42
    %p56 = scmp.eq.s32.totalorder %s14, 3
    %p57 = por %p55, %p56
    %p59 = scmp.ne.s32.totalorder %s42, %s58
    %p60 = scmp.eq.s32.totalorder %s14, 0
    %p61 = por %p59, %p60
    %s63 = sadd.s32 %s62, 1
    %p66 = scmp.eq.s32.totalorder %s8, 3
    %p67 = scmp.ne.s32.totalorder %s62, %s64
    %p68 = scmp.eq.s32.totalorder %s8, 0
    %p69 = por %p67, %p68
    %p70 = scmp.ne.s32.totalorder %s62, %s64
    %p71 = scmp.eq.s32.totalorder %s13, 3
    %p72 = por %p70, %p71
    %p73 = scmp.ne.s32.totalorder %s64, %s65
    %p74 = scmp.eq.s32.totalorder %s13, 0
    %p75 = por %p73, %p74
    %p76 = scmp.ne.s32.totalorder %s64, %s65
    %p77 = scmp.eq.s32.totalorder %s14, 3
    %p78 = por %p76, %p77
    %p80 = scmp.ne.s32.totalorder %s65, %s79
    %p81 = scmp.eq.s32.totalorder %s14, 0
    %p82 = por %p80, %p81
    %s83 = ssub.s32 %s15, %s27
    %p84 = scmp.eq.s32.totalorder %s83, 0
    %s86 = sadd.s32 %s85, 1
    %s87 = scalar_select %p84, %s85, %s86
    %p90 = pneg %p84
    %p91 = scmp.eq.s32.totalorder %s8, 3
    %p92 = por %p90, %p91
    %p93 = scmp.ne.s32.totalorder %s85, %s88
    %p94 = scmp.eq.s32.totalorder %s8, 0
    %p95 = por %p93, %p94
    %p96 = scmp.ne.s32.totalorder %s85, %s88
    %p97 = scmp.eq.s32.totalorder %s13, 3
    %p98 = por %p96, %p97
    %p99 = scmp.ne.s32.totalorder %s88, %s89
    %p100 = scmp.eq.s32.totalorder %s13, 0
    %p101 = por %p99, %p100
    %p102 = scmp.ne.s32.totalorder %s88, %s89
    %p103 = scmp.eq.s32.totalorder %s14, 3
    %p104 = por %p102, %p103
    %p106 = scmp.ne.s32.totalorder %s89, %s105
    %p107 = scmp.eq.s32.totalorder %s14, 0
    %p108 = por %p106, %p107
    %p109 = scmp.le.s32.totalorder 1, %s8
    %p110 = scmp.lt.s32.totalorder %s8, 5
    %p111 = pnand %p109, %p110
    %p112 = pneg %p111
    // Predicated region
    $region9: #{conv2d_block.2} parent=5 // pred_check
      _
    $region10: #{conv2d_block.2} parent=5 // pred_check_branch
      %114 = sbr.rel (%p111) target = $region12
    $region11: #{conv2d_block.2} parent=5 // pred_region
      %s115 = ssub.s32 %s8, 1
      // Predicated region
      $region13: #{conv2d_block.2} parent=11 // pred_check
        %p116 = pneg %p75
      $region14: #{conv2d_block.2} parent=11 // pred_check_branch
        %118 = sbr.rel (%p116) target = $region16
      $region15: #{conv2d_block.2} parent=11 // pred_region
        _
      $region16: #{conv2d_block.2} parent=11 // pred_fallthru
        _
    $region12: #{conv2d_block.2} parent=5 // pred_fallthru
      _
    %p119 = scmp.lt.s32.totalorder %s8, 4
    // Predicated region
    $region17: #{conv2d_block.2} parent=5 // pred_check
      %p120 = pneg %p119
    $region18: #{conv2d_block.2} parent=5 // pred_check_branch
      %122 = sbr.rel (%p120) target = $region20
    $region19: #{conv2d_block.2} parent=5 // pred_region
      // Predicated region
      $region21: #{conv2d_block.2} parent=19 // pred_check
        %p123 = pneg %p48
      $region22: #{conv2d_block.2} parent=19 // pred_check_branch
        %125 = sbr.rel (%p123) target = $region24
      $region23: #{conv2d_block.2} parent=19 // pred_region
        %s126 = smul.u32 %s15, 2
        %s127 = sadd.s32 %s126, %s16
        %p128 = scmp.lt.s32.totalorder %s127, 2
        %s129 = scalar_select %p128, %s127, 2
        %s130 = smul.u32 24, %s129
        %s131 = ssub.s32 64, %s130
        %p132 = scmp.lt.s32.totalorder %s131, 24
        %s133 = scalar_select %p132, %s131, 24
        %s134 = smul.u32 8, %s133
        %p135 = scmp.lt.s32.totalorder %s130, 63
        %s136 = scalar_select %p135, %s130, 63
        %s137 = smul.addr %s136, 8
        %s138 = scalar_lea.vmem %s0, %s137
        %s139 = smul.u32 %s15, 2
        %s140 = sadd.s32 %s139, %s16
        %p141 = scmp.lt.s32.totalorder %s140, 2
        %s142 = scalar_select %p141, %s140, 2
        %s143 = smul.u32 24, %s142
        %s144 = ssub.s32 64, %s143
        %p145 = scmp.lt.s32.totalorder %s144, 24
        %s146 = scalar_select %p145, %s144, 24
        %s147 = smul.u32 8, %s146
      $region24: #{conv2d_block.2} parent=19 // pred_fallthru
        _
    $region20: #{conv2d_block.2} parent=5 // pred_fallthru
      _
    %p148 = scmp.le.s32.totalorder 1, %s8
    %p149 = scmp.lt.s32.totalorder %s8, 5
    %p150 = pnand %p148, %p149
    %p151 = pneg %p150
    // Predicated region
    $region25: #{conv2d_block.2} parent=5 // pred_check
      _
    $region26: #{conv2d_block.2} parent=5 // pred_check_branch
      %153 = sbr.rel (%p150) target = $region28
    $region27: #{conv2d_block.2} parent=5 // pred_region
      %s154 = ssub.s32 %s8, 1
      %s155 = smul.u32 %s17, 2
      %s156 = sadd.s32 %s155, %s18
      %p157 = scmp.lt.s32.totalorder %s156, 2
      %s158 = scalar_select %p157, %s156, 2
      %s159 = smul.u32 24, %s158
      %s160 = ssub.s32 64, %s159
      %p161 = scmp.lt.s32.totalorder %s160, 24
      %s162 = scalar_select %p161, %s160, 24
      %s163 = smul.u32 8, %s162
      %p164 = scmp.lt.s32.totalorder %s159, 63
      %s165 = scalar_select %p164, %s159, 63
      %s166 = smul.addr %s165, 8
      %s167 = scalar_lea.vmem %s0, %s166
      %p168 = pneg %p54
      %p169 = pneg %p51
      %p170 = pneg %p75
      %p171 = pneg %p72
      %p172 = pneg %p101
      %p173 = pneg %p98
      %p174 = scmp.lt.s32.totalorder %s17, 1
      %s175 = scalar_select %p174, %s17, 1
      %s176 = smul.addr %s175, 2
      %s177 = smul.addr %s176, 8
      %s178 = scalar_lea.vmem %s2, %s177
      %s179 = smul.u32 %s17, 2
      %s180 = sadd.s32 %s179, %s18
      %p181 = scmp.lt.s32.totalorder %s180, 2
      %s182 = scalar_select %p181, %s180, 2
      %s183 = smul.u32 24, %s182
      %s184 = ssub.s32 64, %s183
      %p185 = scmp.lt.s32.totalorder %s184, 24
      %s186 = scalar_select %p185, %s184, 24
      %s187 = smul.u32 8, %s186
      %p188 = scmp.lt.s32.totalorder %s183, 63
      %s189 = scalar_select %p188, %s183, 63
      %s190 = smul.addr %s189, 8
      %s191 = scalar_lea.vmem %s0, %s190
      %s192 = smul.u32 %s17, 2
      %s193 = sadd.s32 %s192, %s18
      %p194 = scmp.lt.s32.totalorder %s193, 2
      %s195 = scalar_select %p194, %s193, 2
      %s196 = smul.u32 24, %s195
      %s197 = ssub.s32 64, %s196
      %p198 = scmp.lt.s32.totalorder %s197, 24
      %s199 = scalar_select %p198, %s197, 24
      %s200 = smul.u32 8, %s199
      %p201 = scmp.lt.s32.totalorder %s17, 1
      %s202 = scalar_select %p201, %s17, 1
      %s203 = smul.addr %s202, 2
      %s204 = smul.addr %s203, 8
      %s205 = scalar_lea.vmem %s2, %s204
      %p207 = scmp.eq.s32.totalorder %s18, 0
      // Predicated region
      $region29: #{conv2d_block.2} parent=27 // pred_check
        %p208 = pneg %p207
      $region30: #{conv2d_block.2} parent=27 // pred_check_branch
        %210 = sbr.rel (%p208) target = $region32
      $region31: #{conv2d_block.2} parent=27 // pred_region
        %vm211 = vcmask 64512
        %212 = vst.msk [vmem:[%s205] sm:$0xff] %vm211, 0.0
        %213 = vst.msk [vmem:[%s205 + $0x8] sm:$0xff] %vm211, 0.0
      $region32: #{conv2d_block.2} parent=27 // pred_fallthru
        _
      %v214 = vld [vmem:[%s191] sm:$0xff]
      %v215 = vld [vmem:[%s191 + $0x8] sm:$0xff]
      %v216 = vld [vmem:[%s191 + $0x10] sm:$0xff]
      %v217 = vld [vmem:[%s191 + $0x18] sm:$0xff]
      %v218 = vld [vmem:[%s191 + $0x20] sm:$0xff]
      %v219 = vld [vmem:[%s191 + $0x28] sm:$0xff]
      %v220 = vld [vmem:[%s191 + $0x30] sm:$0xff]
      %v221 = vld [vmem:[%s191 + $0x38] sm:$0xff]
      %v222 = vld [vmem:[%s191 + $0x40] sm:$0xff]
      %v223 = vld [vmem:[%s191 + $0x48] sm:$0xff]
      %v224 = vld [vmem:[%s191 + $0x50] sm:$0xff]
      %v225 = vld [vmem:[%s191 + $0x58] sm:$0xff]
      %v226 = vld [vmem:[%s191 + $0x60] sm:$0xff]
      %v227 = vld [vmem:[%s191 + $0x68] sm:$0xff]
      %v228 = vld [vmem:[%s191 + $0x70] sm:$0xff]
      %v229 = vld [vmem:[%s191 + $0x78] sm:$0xff]
      %v230 = vld [vmem:[%s191 + $0x80] sm:$0xff]
      %v231 = vld [vmem:[%s191 + $0x88] sm:$0xff]
      %v232 = vld [vmem:[%s191 + $0x90] sm:$0xff]
      %v233 = vld [vmem:[%s191 + $0x98] sm:$0xff]
      %v234 = vld [vmem:[%s191 + $0xa0] sm:$0xff]
      %v235 = vld [vmem:[%s191 + $0xa8] sm:$0xff]
      %v236 = vld [vmem:[%s191 + $0xb0] sm:$0xff]
      %v237 = vld [vmem:[%s191 + $0xb8] sm:$0xff]
      %s238 = smul.u32 %s17, 2
      %s239 = sadd.s32 %s238, %s18
      %s240 = smul.u32 %s239, 192
      %v241 = vlaneseq
      %v242 = vshrl.u32 %v241, 7
      %v243 = vadd.s32 %v242, 8
      %v244 = vadd.s32 %v242, 16
      %v245 = vadd.s32 %v242, 24
      %v246 = vadd.s32 %v242, 32
      %v247 = vadd.s32 %v242, 40
      %v248 = vadd.s32 %v242, 48
      %v249 = vadd.s32 %v242, 56
      %v250 = vadd.s32 %v242, 64
      %v251 = vadd.s32 %v242, 72
      %v252 = vadd.s32 %v242, 80
      %v253 = vadd.s32 %v242, 88
      %v254 = vadd.s32 %v242, 96
      %v255 = vadd.s32 %v242, 104
      %v256 = vadd.s32 %v242, 112
      %v257 = vadd.s32 %v242, 120
      %v258 = vadd.s32 %v242, 128
      %v259 = vadd.s32 %v242, 136
      %v260 = vadd.s32 %v242, 144
      %v261 = vadd.s32 %v242, 152
      %v262 = vadd.s32 %v242, 160
      %v263 = vadd.s32 %v242, 168
      %v264 = vadd.s32 %v242, 176
      %v265 = vadd.s32 %v242, 184
      %v266 = vstv %s240
      %v267 = vadd.s32 %v266, %v242
      %v268 = vadd.s32 %v266, %v243
      %v269 = vadd.s32 %v266, %v244
      %v270 = vadd.s32 %v266, %v245
      %v271 = vadd.s32 %v266, %v246
      %v272 = vadd.s32 %v266, %v247
      %v273 = vadd.s32 %v266, %v248
      %v274 = vadd.s32 %v266, %v249
      %v275 = vadd.s32 %v266, %v250
      %v276 = vadd.s32 %v266, %v251
      %v277 = vadd.s32 %v266, %v252
      %v278 = vadd.s32 %v266, %v253
      %v279 = vadd.s32 %v266, %v254
      %v280 = vadd.s32 %v266, %v255
      %v281 = vadd.s32 %v266, %v256
      %v282 = vadd.s32 %v266, %v257
      %v283 = vadd.s32 %v266, %v258
      %v284 = vadd.s32 %v266, %v259
      %v285 = vadd.s32 %v266, %v260
      %v286 = vadd.s32 %v266, %v261
      %v287 = vadd.s32 %v266, %v262
      %v288 = vadd.s32 %v266, %v263
      %v289 = vadd.s32 %v266, %v264
      %v290 = vadd.s32 %v266, %v265
      %vm291 = vcmp.lt.s32.totalorder %v267, 512
      %vm292 = vcmp.lt.s32.totalorder %v268, 512
      %vm293 = vcmp.lt.s32.totalorder %v269, 512
      %vm294 = vcmp.lt.s32.totalorder %v270, 512
      %vm295 = vcmp.lt.s32.totalorder %v271, 512
      %vm296 = vcmp.lt.s32.totalorder %v272, 512
      %vm297 = vcmp.lt.s32.totalorder %v273, 512
      %vm298 = vcmp.lt.s32.totalorder %v274, 512
      %vm299 = vcmp.lt.s32.totalorder %v275, 512
      %vm300 = vcmp.lt.s32.totalorder %v276, 512
      %vm301 = vcmp.lt.s32.totalorder %v277, 512
      %vm302 = vcmp.lt.s32.totalorder %v278, 512
      %vm303 = vcmp.lt.s32.totalorder %v279, 512
      %vm304 = vcmp.lt.s32.totalorder %v280, 512
      %vm305 = vcmp.lt.s32.totalorder %v281, 512
      %vm306 = vcmp.lt.s32.totalorder %v282, 512
      %vm307 = vcmp.lt.s32.totalorder %v283, 512
      %vm308 = vcmp.lt.s32.totalorder %v284, 512
      %vm309 = vcmp.lt.s32.totalorder %v285, 512
      %vm310 = vcmp.lt.s32.totalorder %v286, 512
      %vm311 = vcmp.lt.s32.totalorder %v287, 512
      %vm312 = vcmp.lt.s32.totalorder %v288, 512
      %vm313 = vcmp.lt.s32.totalorder %v289, 512
      %vm314 = vcmp.lt.s32.totalorder %v290, 512
      %v315 = vsel %vm291, %v214, 0.0
      %v316 = vsel %vm292, %v215, 0.0
      %v317 = vsel %vm293, %v216, 0.0
      %v318 = vsel %vm294, %v217, 0.0
      %v319 = vsel %vm295, %v218, 0.0
      %v320 = vsel %vm296, %v219, 0.0
      %v321 = vsel %vm297, %v220, 0.0
      %v322 = vsel %vm298, %v221, 0.0
      %v323 = vsel %vm299, %v222, 0.0
      %v324 = vsel %vm300, %v223, 0.0
      %v325 = vsel %vm301, %v224, 0.0
      %v326 = vsel %vm302, %v225, 0.0
      %v327 = vsel %vm303, %v226, 0.0
      %v328 = vsel %vm304, %v227, 0.0
      %v329 = vsel %vm305, %v228, 0.0
      %v330 = vsel %vm306, %v229, 0.0
      %v331 = vsel %vm307, %v230, 0.0
      %v332 = vsel %vm308, %v231, 0.0
      %v333 = vsel %vm309, %v232, 0.0
      %v334 = vsel %vm310, %v233, 0.0
      %v335 = vsel %vm311, %v234, 0.0
      %v336 = vsel %vm312, %v235, 0.0
      %v337 = vsel %vm313, %v236, 0.0
      %v338 = vsel %vm314, %v237, 0.0
      %v339 = vpack.c.bf16 %v316, %v315
      %v340 = vpack.c.bf16 %v318, %v317
      %v341 = vpack.c.bf16 %v320, %v319
      %v342 = vpack.c.bf16 %v322, %v321
      %v343 = vpack.c.bf16 %v324, %v323
      %v344 = vpack.c.bf16 %v326, %v325
      %v345 = vpack.c.bf16 %v328, %v327
      %v346 = vpack.c.bf16 %v330, %v329
      %v347 = vpack.c.bf16 %v332, %v331
      %v348 = vpack.c.bf16 %v334, %v333
      %v349 = vpack.c.bf16 %v336, %v335
      %v350 = vpack.c.bf16 %v338, %v337
      %v351 = vld [vmem:[%s1] sm:$0x3]
      %vm352 = vcmask 31744
      %v354 = vsel %vm352, %v339, 0
      %v357 = vsel %vm352, %v340, 0
      %v360 = vsel %vm352, %v341, 0
      %v363 = vsel %vm352, %v342, 0
      %v366 = vsel %vm352, %v343, 0
      %v369 = vsel %vm352, %v344, 0
      %v372 = vsel %vm352, %v345, 0
      %v375 = vsel %vm352, %v346, 0
      %v378 = vsel %vm352, %v347, 0
      %v381 = vsel %vm352, %v348, 0
      %v384 = vsel %vm352, %v349, 0
      %v387 = vsel %vm352, %v350, 0
      %vm389 = vcmask 1041408
      %v391 = vsel %vm389, %v351, 0
      %393 = vmatpush.bf16.msra.mxu0 0
      %394 = vmatpush.bf16.msra.mxu0 0
      %395 = vmatpush.bf16.msra.mxu0 0
      %396 = vmatpush.bf16.msra.mxu0 0
      %397 = vmatpush.bf16.msra.mxu0 0
      %398 = vmatpush.bf16.msra.mxu0 0
      %399 = vmatpush.bf16.msra.mxu0 0
      %400 = vmatpush.bf16.msra.mxu0 %v391
      %401 = vmatmul.bf16.gmra.mxu0 %v354
      %v402 = vpop.f32.mrf.mxu0
      %v403 = vadd.f32 0.0, %v402
      %v404 = vpop.f32.mrf.mxu0
      %v405 = vadd.f32 0.0, %v404
      %406 = vmatmul.bf16.gmra.mxu0 %v357
      %v407 = vpop.f32.mrf.mxu0
      %v408 = vadd.f32 0.0, %v407
      %v409 = vpop.f32.mrf.mxu0
      %v410 = vadd.f32 0.0, %v409
      %411 = vmatmul.bf16.gmra.mxu0 %v360
      %v412 = vpop.f32.mrf.mxu0
      %v413 = vadd.f32 0.0, %v412
      %v414 = vpop.f32.mrf.mxu0
      %v415 = vadd.f32 0.0, %v414
      %416 = vmatmul.bf16.gmra.mxu0 %v363
      %v417 = vpop.f32.mrf.mxu0
      %v418 = vadd.f32 0.0, %v417
      %v419 = vpop.f32.mrf.mxu0
      %v420 = vadd.f32 0.0, %v419
      %421 = vmatmul.bf16.gmra.mxu0 %v366
      %v422 = vpop.f32.mrf.mxu0
      %v423 = vadd.f32 0.0, %v422
      %v424 = vpop.f32.mrf.mxu0
      %v425 = vadd.f32 0.0, %v424
      %426 = vmatmul.bf16.gmra.mxu0 %v369
      %v427 = vpop.f32.mrf.mxu0
      %v428 = vadd.f32 0.0, %v427
      %v429 = vpop.f32.mrf.mxu0
      %v430 = vadd.f32 0.0, %v429
      %431 = vmatmul.bf16.gmra.mxu0 %v372
      %v432 = vpop.f32.mrf.mxu0
      %v433 = vadd.f32 0.0, %v432
      %v434 = vpop.f32.mrf.mxu0
      %v435 = vadd.f32 0.0, %v434
      %436 = vmatmul.bf16.gmra.mxu0 %v375
      %v437 = vpop.f32.mrf.mxu0
      %v438 = vadd.f32 0.0, %v437
      %v439 = vpop.f32.mrf.mxu0
      %v440 = vadd.f32 0.0, %v439
      %441 = vmatmul.bf16.gmra.mxu0 %v378
      %v442 = vpop.f32.mrf.mxu0
      %v443 = vadd.f32 0.0, %v442
      %v444 = vpop.f32.mrf.mxu0
      %v445 = vadd.f32 0.0, %v444
      %446 = vmatmul.bf16.gmra.mxu0 %v381
      %v447 = vpop.f32.mrf.mxu0
      %v448 = vadd.f32 0.0, %v447
      %v449 = vpop.f32.mrf.mxu0
      %v450 = vadd.f32 0.0, %v449
      %451 = vmatmul.bf16.gmra.mxu0 %v384
      %v452 = vpop.f32.mrf.mxu0
      %v453 = vadd.f32 0.0, %v452
      %v454 = vpop.f32.mrf.mxu0
      %v455 = vadd.f32 0.0, %v454
      %456 = vmatmul.bf16.gmra.mxu0 %v387
      %v457 = vpop.f32.mrf.mxu0
      %v458 = vadd.f32 0.0, %v457
      %v459 = vpop.f32.mrf.mxu0
      %v460 = vadd.f32 0.0, %v459
      %461 = vdwg.mxu0
      %v462 = vld [vmem:[%s205] sm:$0xff]
      %vm463 = vcmask 64512
      %v464 = vsel %vm463, %v403, 0.0
      %v465 = vsel %vm463, %v405, 0.0
      %v466 = vadd.f32 %v464, %v465
      %v467 = vsel %vm463, %v408, 0.0
      %v468 = vadd.f32 %v466, %v467
      %v469 = vsel %vm463, %v410, 0.0
      %v470 = vadd.f32 %v468, %v469
      %v471 = vsel %vm463, %v413, 0.0
      %v472 = vadd.f32 %v470, %v471
      %v473 = vsel %vm463, %v415, 0.0
      %v474 = vadd.f32 %v472, %v473
      %v475 = vsel %vm463, %v418, 0.0
      %v476 = vadd.f32 %v474, %v475
      %v477 = vsel %vm463, %v420, 0.0
      %v478 = vadd.f32 %v476, %v477
      %v479 = vsel %vm463, %v423, 0.0
      %v480 = vadd.f32 %v478, %v479
      %v481 = vsel %vm463, %v425, 0.0
      %v482 = vadd.f32 %v480, %v481
      %v483 = vsel %vm463, %v428, 0.0
      %v484 = vadd.f32 %v482, %v483
      %v485 = vsel %vm463, %v430, 0.0
      %v486 = vadd.f32 %v484, %v485
      %v487 = vsel %vm463, %v433, 0.0
      %v488 = vadd.f32 %v486, %v487
      %v489 = vsel %vm463, %v435, 0.0
      %v490 = vadd.f32 %v488, %v489
      %v491 = vsel %vm463, %v438, 0.0
      %v492 = vadd.f32 %v490, %v491
      %v493 = vsel %vm463, %v440, 0.0
      %v494 = vadd.f32 %v492, %v493
      %v495 = vsel %vm463, %v443, 0.0
      %v496 = vadd.f32 %v494, %v495
      %v497 = vsel %vm463, %v445, 0.0
      %v498 = vadd.f32 %v496, %v497
      %v499 = vsel %vm463, %v448, 0.0
      %v500 = vadd.f32 %v498, %v499
      %v501 = vsel %vm463, %v450, 0.0
      %v502 = vadd.f32 %v500, %v501
      %v503 = vsel %vm463, %v453, 0.0
      %v504 = vadd.f32 %v502, %v503
      %v505 = vsel %vm463, %v455, 0.0
      %v506 = vadd.f32 %v504, %v505
      %v507 = vsel %vm463, %v458, 0.0
      %v508 = vadd.f32 %v506, %v507
      %v509 = vsel %vm463, %v460, 0.0
      %v510 = vadd.f32 %v508, %v509
      %v511 = vadd.f32 %v462, %v510
      %512 = vst.msk [vmem:[%s205] sm:$0xff] %vm463, %v511
      %v513 = vld [vmem:[%s205 + $0x8] sm:$0xff]
      %v514 = vmul.f32 %v403, %v403
      %v515 = vmul.f32 %v405, %v405
      %v516 = vmul.f32 %v408, %v408
      %v517 = vmul.f32 %v410, %v410
      %v518 = vmul.f32 %v413, %v413
      %v519 = vmul.f32 %v415, %v415
      %v520 = vmul.f32 %v418, %v418
      %v521 = vmul.f32 %v420, %v420
      %v522 = vmul.f32 %v423, %v423
      %v523 = vmul.f32 %v425, %v425
      %v524 = vmul.f32 %v428, %v428
      %v525 = vmul.f32 %v430, %v430
      %v526 = vmul.f32 %v433, %v433
      %v527 = vmul.f32 %v435, %v435
      %v528 = vmul.f32 %v438, %v438
      %v529 = vmul.f32 %v440, %v440
      %v530 = vmul.f32 %v443, %v443
      %v531 = vmul.f32 %v445, %v445
      %v532 = vmul.f32 %v448, %v448
      %v533 = vmul.f32 %v450, %v450
      %v534 = vmul.f32 %v453, %v453
      %v535 = vmul.f32 %v455, %v455
      %v536 = vmul.f32 %v458, %v458
      %v537 = vmul.f32 %v460, %v460
      %v538 = vsel %vm463, %v514, 0.0
      %v539 = vsel %vm463, %v515, 0.0
      %v540 = vadd.f32 %v538, %v539
      %v541 = vsel %vm463, %v516, 0.0
      %v542 = vadd.f32 %v540, %v541
      %v543 = vsel %vm463, %v517, 0.0
      %v544 = vadd.f32 %v542, %v543
      %v545 = vsel %vm463, %v518, 0.0
      %v546 = vadd.f32 %v544, %v545
      %v547 = vsel %vm463, %v519, 0.0
      %v548 = vadd.f32 %v546, %v547
      %v549 = vsel %vm463, %v520, 0.0
      %v550 = vadd.f32 %v548, %v549
      %v551 = vsel %vm463, %v521, 0.0
      %v552 = vadd.f32 %v550, %v551
      %v553 = vsel %vm463, %v522, 0.0
      %v554 = vadd.f32 %v552, %v553
      %v555 = vsel %vm463, %v523, 0.0
      %v556 = vadd.f32 %v554, %v555
      %v557 = vsel %vm463, %v524, 0.0
      %v558 = vadd.f32 %v556, %v557
      %v559 = vsel %vm463, %v525, 0.0
      %v560 = vadd.f32 %v558, %v559
      %v561 = vsel %vm463, %v526, 0.0
      %v562 = vadd.f32 %v560, %v561
      %v563 = vsel %vm463, %v527, 0.0
      %v564 = vadd.f32 %v562, %v563
      %v565 = vsel %vm463, %v528, 0.0
      %v566 = vadd.f32 %v564, %v565
      %v567 = vsel %vm463, %v529, 0.0
      %v568 = vadd.f32 %v566, %v567
      %v569 = vsel %vm463, %v530, 0.0
      %v570 = vadd.f32 %v568, %v569
      %v571 = vsel %vm463, %v531, 0.0
      %v572 = vadd.f32 %v570, %v571
      %v573 = vsel %vm463, %v532, 0.0
      %v574 = vadd.f32 %v572, %v573
      %v575 = vsel %vm463, %v533, 0.0
      %v576 = vadd.f32 %v574, %v575
      %v577 = vsel %vm463, %v534, 0.0
      %v578 = vadd.f32 %v576, %v577
      %v579 = vsel %vm463, %v535, 0.0
      %v580 = vadd.f32 %v578, %v579
      %v581 = vsel %vm463, %v536, 0.0
      %v582 = vadd.f32 %v580, %v581
      %v583 = vsel %vm463, %v537, 0.0
      %v584 = vadd.f32 %v582, %v583
      %v585 = vadd.f32 %v513, %v584
      %586 = vst.msk [vmem:[%s205 + $0x8] sm:$0xff] %vm463, %v585
      %p587 = scmp.lt.s32.totalorder %s17, 1
      %s588 = scalar_select %p587, %s17, 1
      %s589 = smul.addr %s588, 2
      %s590 = smul.addr %s589, 8
      %s591 = scalar_lea.vmem %s2, %s590
      // Predicated region
      $region33: #{conv2d_block.2} parent=27 // pred_check
        %p592 = pneg %p98
      $region34: #{conv2d_block.2} parent=27 // pred_check_branch
        %594 = sbr.rel (%p592) target = $region36
      $region35: #{conv2d_block.2} parent=27 // pred_region
        _
      $region36: #{conv2d_block.2} parent=27 // pred_fallthru
        _
    $region28: #{conv2d_block.2} parent=5 // pred_fallthru
      _
    %p595 = scmp.le.s32.totalorder 2, %s8
    // Predicated region
    $region37: #{conv2d_block.2} parent=5 // pred_check
      %p596 = pneg %p595
    $region38: #{conv2d_block.2} parent=5 // pred_check_branch
      %598 = sbr.rel (%p596) target = $region40
    $region39: #{conv2d_block.2} parent=5 // pred_region
      %s599 = ssub.s32 %s8, 2
      // Predicated region
      $region41: #{conv2d_block.2} parent=39 // pred_check
        %p600 = pneg %p104
      $region42: #{conv2d_block.2} parent=39 // pred_check_branch
        %602 = sbr.rel (%p600) target = $region44
      $region43: #{conv2d_block.2} parent=39 // pred_region
        %p603 = scmp.lt.s32.totalorder %s19, 1
        %s604 = scalar_select %p603, %s19, 1
        %s605 = smul.addr %s604, 2
        %s606 = smul.addr %s605, 8
        %s607 = scalar_lea.vmem %s2, %s606
      $region44: #{conv2d_block.2} parent=39 // pred_fallthru
        _
    $region40: #{conv2d_block.2} parent=5 // pred_fallthru
      _
  $region6: #{conv2d_block.2} parent=0 // loop_footer
    %s12 = sadd.s32 1, %s8
  $region7: #{conv2d_block.2} parent=0 // loop_footer_branch
    %7 = sbr.rel target = $region3
  $region8: #{conv2d_block.2} parent=0 // loop_exit
    _

</llo_original>
